<compile_context>
chip_gen: v5e
topology: v5e:2x2
jax: 0.10.0
libtpu: 0.0.40
codegen_flags: <defaults>
</compile_context>

<pallas_src>
import numpy as np
import jax
import jax.numpy as jnp
from jax.experimental import pallas as pl
from jax.experimental.pallas import tpu as pltpu

KEYS = ("0", "1", "2", "3", "pool")


def _round_up(x, m):
    return -(-x // m) * m


# ----------------------------------------------------------------------------
# Adaptive average-pool expressed as a (H*W, oh*ow) matrix (PyTorch semantics:
# bin i covers [floor(i*H/oh), ceil((i+1)*H/oh)) ).
# ----------------------------------------------------------------------------
def _adaptive_pool_matrix_1d(in_size, out_size):
    m = np.zeros((out_size, in_size), dtype=np.float64)
    for i in range(out_size):
        start = (i * in_size) // out_size
        end = -((-((i + 1) * in_size)) // out_size)  # ceil div
        m[i, start:end] = 1.0 / float(end - start)
    return m


def adaptive_pool_matrix(in_hw, out_hw):
    mh = _adaptive_pool_matrix_1d(in_hw[0], out_hw[0])
    mw = _adaptive_pool_matrix_1d(in_hw[1], out_hw[1])
    # pooled[i*ow+j] = sum_{h,w} mh[i,h]*mw[j,w]*x[h*W+w]  ->  kron(mh, mw)
    return np.kron(mh, mw).T  # (H*W, oh*ow)


# ----------------------------------------------------------------------------
# One-time host-side parameter preparation:
#   - fold pooling into fc0, concatenate all levels into one (K_pad, P) weight
#   - pack w1/w2/wc into one lane-padded (3*P, P) slab
#   - pack the four biases into one (4, P) f32 tile
# ----------------------------------------------------------------------------
def prepare_fused_params(params, feature_shapes, pool_sizes, keys=KEYS):
    """feature_shapes: {key: (B, C, H, W)}; params: dict from init_params."""
    w0 = np.asarray(params["w0"], np.float64)          # (num_features, d0)
    d0 = w0.shape[1]
    blocks, row = [], 0
    for k in keys:
        _, c, h, w = feature_shapes[k]
        oh, ow = pool_sizes[k]
        area = oh * ow
        m = adaptive_pool_matrix((h, w), (oh, ow))      # (H*W, area)
        w0_k = w0[row:row + c * area, :].reshape(c, area, d0)
        row += c * area
        # fused[(c, hw), d] = sum_p M[hw, p] * W0[(c, p), d]
        blocks.append(np.einsum("hp,cpd->chd", m, w0_k).reshape(c * h * w, d0))
    assert row == w0.shape[0], "feature ordering mismatch with W0 rows"

    w0_cat = np.concatenate(blocks, axis=0)             # (K_total, d0)
    k_total = int(w0_cat.shape[0])
    k_pad = _round_up(k_total, 128)

    d1 = int(np.asarray(params["w1"]).shape[1])
    d2 = int(np.asarray(params["w2"]).shape[1])
    nc = int(np.asarray(params["wc"]).shape[1])
    P = _round_up(max(d0, d1, d2, nc), 128)             # common padded width

    # fc0 (pool-folded), rows padded to k_pad, output lanes padded to P.
    w0_pad = np.zeros((k_pad, P), np.float64)
    w0_pad[:k_total, :d0] = w0_cat

    # One slab holding w1 / w2 / wc, each in a P-row, P-lane zero-padded block.
    slab = np.zeros((3 * P, P), np.float64)
    slab[0:d0, 0:d1] = np.asarray(params["w1"], np.float64)
    slab[P:P + d1, 0:d2] = np.asarray(params["w2"], np.float64)
    slab[2 * P:2 * P + d2, 0:nc] = np.asarray(params["wc"], np.float64)

    bias = np.zeros((4, P), np.float32)                 # one lane-aligned tile
    for i, name in enumerate(("b0", "b1", "b2", "bc")):
        b = np.asarray(params[name], np.float32).reshape(-1)
        bias[i, : b.shape[0]] = b

    return dict(keys=tuple(keys),
                w0=jnp.asarray(w0_pad, jnp.bfloat16),
                wslab=jnp.asarray(slab, jnp.bfloat16),
                bias=jnp.asarray(bias, jnp.float32),
                k_total=k_total, k_pad=k_pad, P=P, nc=nc)


# ----------------------------------------------------------------------------
# Single fused kernel: (pool-folded) fc0+ReLU -> fc1+ReLU -> fc2+ReLU
#                      -> fc_classifier + sigmoid.  All dots are bf16 x bf16
#                      with f32 accumulation; nothing leaves VMEM until the
#                      final (B, nc) store.
# ----------------------------------------------------------------------------
def _make_head_kernel(P, nc):
    def kernel(x_ref, w0_ref, wslab_ref, bias_ref, o_ref):
        # fc0 (adaptive pooling folded into the weight)
        h = jnp.dot(x_ref[...], w0_ref[...], preferred_element_type=jnp.float32)
        h = jnp.maximum(h + bias_ref[0:1, :], 0.0)
        # Dropout(p=0.5) is identity in eval mode.
        # TODO(synk): training-mode branch (dropout masks + raw logits) not implemented.
        h = jnp.dot(h.astype(jnp.bfloat16), wslab_ref[0:P, :],
                    preferred_element_type=jnp.float32)
        h = jnp.maximum(h + bias_ref[1:2, :], 0.0)
        h = jnp.dot(h.astype(jnp.bfloat16), wslab_ref[P:2 * P, :],
                    preferred_element_type=jnp.float32)
        h = jnp.maximum(h + bias_ref[2:3, :], 0.0)
        logits = jnp.dot(h.astype(jnp.bfloat16), wslab_ref[2 * P:3 * P, :],
                         preferred_element_type=jnp.float32) + bias_ref[3:4, :]
        o_ref[...] = jax.nn.sigmoid(logits[:, :nc])

    return kernel


def mlp_classifier_head_forward(attention_features, fused):
    keys = fused["keys"]
    xs = []
    for k in keys:
        x = attention_features[k]                       # NCHW, contiguous
        xs.append(x.reshape(x.shape[0], -1))            # free bitcast
    B = xs[0].shape[0]
    k_total, k_pad, P, nc = (fused["k_total"], fused["k_pad"],
                             fused["P"], fused["nc"])
    if k_pad > k_total:                                  # lane-align K once
        xs.append(jnp.zeros((B, k_pad - k_total), xs[0].dtype))
    x_cat = jnp.concatenate(xs, axis=1).astype(jnp.bfloat16)  # (B, k_pad)

    vmem = pl.BlockSpec(memory_space=pltpu.MemorySpace.VMEM)
    # Everything (x, W0 ~0.75 MB bf16, slab ~0.1 MB, bias) fits far below the
    # VMEM scoped default on every generation; single call, no grid.
    return pl.pallas_call(
        _make_head_kernel(P, nc),
        out_shape=jax.ShapeDtypeStruct((B, nc), jnp.float32),
        in_specs=[vmem, vmem, vmem, vmem],
        out_specs=vmem,
    )(x_cat, fused["w0"], fused["wslab"], fused["bias"])


# ----------------------------------------------------------------------------
# Deterministic parameter init (shapes from the module __init__).
# ----------------------------------------------------------------------------
def init_params(key, num_features, hidden_layer_sizes, num_classes):
    dims = [num_features] + list(hidden_layer_sizes) + [num_classes]
    names = ["0", "1", "2", "c"]
    params = {}
    for name, din, dout in zip(names, dims[:-1], dims[1:]):
        key, kw, kb = jax.random.split(key, 3)
        bound = 1.0 / np.sqrt(din)
        params["w" + name] = jax.random.uniform(kw, (din, dout), jnp.float32,
                                                -bound, bound)
        params["b" + name] = jax.random.uniform(kb, (1, dout), jnp.float32,
                                                -bound, bound)
    return params


# ----------------------------------------------------------------------------
# Pure numpy reference (mirrors the PyTorch forward in eval mode, f32).
# ----------------------------------------------------------------------------
def reference_forward(attention_features, pool_sizes, params, keys=KEYS):
    feats = []
    for k in keys:
        x = np.asarray(attention_features[k])
        b, c, h, w = x.shape
        oh, ow = pool_sizes[k]
        pooled = np.zeros((b, c, oh, ow), np.float32)
        for i in range(oh):
            hs = (i * h) // oh
            he = -((-((i + 1) * h)) // oh)
            for j in range(ow):
                ws = (j * w) // ow
                we = -((-((j + 1) * w)) // ow)
                pooled[:, :, i, j] = x[:, :, hs:he, ws:we].mean(axis=(2, 3))
        feats.append(pooled.reshape(b, -1))
    concat = np.concatenate(feats, axis=1)

    def lin(v, w, bias):
        return v @ np.asarray(w) + np.asarray(bias)

    h0 = np.maximum(lin(concat, params["w0"], params["b0"]), 0.0)
    h1 = np.maximum(lin(h0, params["w1"], params["b1"]), 0.0)
    h2 = np.maximum(lin(h1, params["w2"], params["b2"]), 0.0)
    logits = lin(h2, params["wc"], params["bc"])
    return 1.0 / (1.0 + np.exp(-logits))


if __name__ == "__main__":
    B = 2
    bottleneck_filters = 8        # input channels must equal bottleneck_filters
    num_classes = 5
    hidden_layer_sizes = [64, 32, 64]
    spatial = {"0": (16, 16), "1": (7, 9), "2": (4, 4), "3": (4, 4), "pool": (2, 2)}
    pool_sizes = {"0": (4, 4), "1": (2, 2), "2": (2, 2), "3": (1, 1), "pool": (1, 1)}

    num_features = sum(p[0] * p[1] for p in pool_sizes.values()) * bottleneck_filters

    key = jax.random.PRNGKey(0)
    key, pkey = jax.random.split(key)
    params = init_params(pkey, num_features, hidden_layer_sizes, num_classes)

    attention_features = {}
    feature_shapes = {}
    for k in KEYS:
        key, sub = jax.random.split(key)
        h, w = spatial[k]
        attention_features[k] = jax.random.normal(
            sub, (B, bottleneck_filters, h, w), jnp.float32)
        feature_shapes[k] = (B, bottleneck_filters, h, w)

    # One-time weight preprocessing (folds pooling into fc0, packs weights/biases).
    fused = prepare_fused_params(params, feature_shapes, pool_sizes)

    out = mlp_classifier_head_forward(attention_features, fused)
    out = jax.block_until_ready(out)

    ref = reference_forward(attention_features, pool_sizes, params)
    assert out.shape == (B, num_classes)
    # bf16 weights/activations (f32 accumulation) vs f32 reference.
    np.testing.assert_allclose(np.asarray(out), ref, rtol=5e-2, atol=2e-2)
    print("KERNEL_OK")
</pallas_src>

<mosaic_0001>
module attributes {stable_mosaic.version = 11 : i64} {
  func.func @kernel(%arg0: memref<2x2944xbf16, #tpu.memory_space<vmem>>, %arg1: memref<2944x128xbf16, #tpu.memory_space<vmem>>, %arg2: memref<384x128xbf16, #tpu.memory_space<vmem>>, %arg3: memref<4x128xf32, #tpu.memory_space<vmem>>, %arg4: memref<2x5xf32, #tpu.memory_space<vmem>>) attributes {dimension_semantics = [], scalar_prefetch = 0 : i64, scratch_operands = 0 : i64, tpu.core_type = #tpu.core_type<tc>} {
    %c0 = arith.constant 0 : index
    %c0_0 = arith.constant 0 : index
    %0 = vector.load %arg0[%c0, %c0_0] : memref<2x2944xbf16, #tpu.memory_space<vmem>>, vector<2x2944xbf16>
    %c0_1 = arith.constant 0 : index
    %c0_2 = arith.constant 0 : index
    %1 = vector.load %arg1[%c0_1, %c0_2] : memref<2944x128xbf16, #tpu.memory_space<vmem>>, vector<2944x128xbf16>
    %cst = arith.constant dense<0.000000e+00> : vector<2x128xf32>
    %2 = tpu.matmul %0, %1, %cst {dimension_numbers = #tpu.dot_dimension_numbers<[1], [0], [0], [1], [0, 0, 1, 1], [], []>} : vector<2x2944xbf16>, vector<2944x128xbf16>, vector<2x128xf32> -> vector<2x128xf32>
    %c0_3 = arith.constant 0 : index
    %c0_4 = arith.constant 0 : index
    %3 = vector.load %arg3[%c0_3, %c0_4] : memref<4x128xf32, #tpu.memory_space<vmem>>, vector<1x128xf32>
    %4 = vector.broadcast %3 : vector<1x128xf32> to vector<2x128xf32>
    %5 = arith.addf %2, %4 : vector<2x128xf32>
    %cst_5 = arith.constant 0.000000e+00 : f32
    %6 = vector.broadcast %cst_5 : f32 to vector<2x128xf32>
    %7 = arith.maximumf %5, %6 : vector<2x128xf32>
    %8 = arith.truncf %7 : vector<2x128xf32> to vector<2x128xbf16>
    %c0_6 = arith.constant 0 : index
    %c0_7 = arith.constant 0 : index
    %9 = vector.load %arg2[%c0_6, %c0_7] : memref<384x128xbf16, #tpu.memory_space<vmem>>, vector<128x128xbf16>
    %cst_8 = arith.constant dense<0.000000e+00> : vector<2x128xf32>
    %10 = tpu.matmul %8, %9, %cst_8 {dimension_numbers = #tpu.dot_dimension_numbers<[1], [0], [0], [1], [0, 0, 1, 1], [], []>} : vector<2x128xbf16>, vector<128x128xbf16>, vector<2x128xf32> -> vector<2x128xf32>
    %c1 = arith.constant 1 : index
    %c0_9 = arith.constant 0 : index
    %11 = vector.load %arg3[%c1, %c0_9] : memref<4x128xf32, #tpu.memory_space<vmem>>, vector<1x128xf32>
    %12 = vector.broadcast %11 : vector<1x128xf32> to vector<2x128xf32>
    %13 = arith.addf %10, %12 : vector<2x128xf32>
    %cst_10 = arith.constant 0.000000e+00 : f32
    %14 = vector.broadcast %cst_10 : f32 to vector<2x128xf32>
    %15 = arith.maximumf %13, %14 : vector<2x128xf32>
    %16 = arith.truncf %15 : vector<2x128xf32> to vector<2x128xbf16>
    %c128 = arith.constant 128 : index
    %c0_11 = arith.constant 0 : index
    %17 = vector.load %arg2[%c128, %c0_11] : memref<384x128xbf16, #tpu.memory_space<vmem>>, vector<128x128xbf16>
    %cst_12 = arith.constant dense<0.000000e+00> : vector<2x128xf32>
    %18 = tpu.matmul %16, %17, %cst_12 {dimension_numbers = #tpu.dot_dimension_numbers<[1], [0], [0], [1], [0, 0, 1, 1], [], []>} : vector<2x128xbf16>, vector<128x128xbf16>, vector<2x128xf32> -> vector<2x128xf32>
    %c2 = arith.constant 2 : index
    %c0_13 = arith.constant 0 : index
    %19 = vector.load %arg3[%c2, %c0_13] : memref<4x128xf32, #tpu.memory_space<vmem>>, vector<1x128xf32>
    %20 = vector.broadcast %19 : vector<1x128xf32> to vector<2x128xf32>
    %21 = arith.addf %18, %20 : vector<2x128xf32>
    %cst_14 = arith.constant 0.000000e+00 : f32
    %22 = vector.broadcast %cst_14 : f32 to vector<2x128xf32>
    %23 = arith.maximumf %21, %22 : vector<2x128xf32>
    %24 = arith.truncf %23 : vector<2x128xf32> to vector<2x128xbf16>
    %c256 = arith.constant 256 : index
    %c0_15 = arith.constant 0 : index
    %25 = vector.load %arg2[%c256, %c0_15] : memref<384x128xbf16, #tpu.memory_space<vmem>>, vector<128x128xbf16>
    %cst_16 = arith.constant dense<0.000000e+00> : vector<2x128xf32>
    %26 = tpu.matmul %24, %25, %cst_16 {dimension_numbers = #tpu.dot_dimension_numbers<[1], [0], [0], [1], [0, 0, 1, 1], [], []>} : vector<2x128xbf16>, vector<128x128xbf16>, vector<2x128xf32> -> vector<2x128xf32>
    %c3 = arith.constant 3 : index
    %c0_17 = arith.constant 0 : index
    %27 = vector.load %arg3[%c3, %c0_17] : memref<4x128xf32, #tpu.memory_space<vmem>>, vector<1x128xf32>
    %28 = vector.broadcast %27 : vector<1x128xf32> to vector<2x128xf32>
    %29 = arith.addf %26, %28 : vector<2x128xf32>
    %30 = vector.extract_strided_slice %29 {offsets = [0, 0], sizes = [2, 5], strides = [1, 1]} : vector<2x128xf32> to vector<2x5xf32>
    %31 = arith.negf %30 : vector<2x5xf32>
    %32 = math.exp %31 : vector<2x5xf32>
    %cst_18 = arith.constant 1.000000e+00 : f32
    %33 = vector.broadcast %cst_18 : f32 to vector<2x5xf32>
    %34 = arith.addf %33, %32 : vector<2x5xf32>
    %35 = arith.divf %33, %34 : vector<2x5xf32>
    %c0_19 = arith.constant 0 : index
    %c0_20 = arith.constant 0 : index
    %36 = vector.load %arg4[%c0_19, %c0_20] : memref<2x5xf32, #tpu.memory_space<vmem>>, vector<2x5xf32>
    tpu.vector_store %arg4[%c0_19, %c0_20], %35 {strides = array<i32>} : memref<2x5xf32, #tpu.memory_space<vmem>>, vector<2x5xf32>,
    return
  }
}

</mosaic_0001>

<llo_original>
// kernel: tpu_custom_call.1
$region0: #{tpu_custom_call.1}
  #allocation0 [shape = 'u32[]', space=smem, size = 0x4, offset = 0x4, fixed_abs, tag = 'smem constant byte address 0x4 - core index']
  #allocation1 [shape = 'u32[72,128]{1,0:T(1,128)}', space=vmem, size = 0x9000, scoped, tag = 'internal scratch']
  %s0 = inlined_call_operand.hbm [shape: bf16[2,2944], index: 0, kind: input, shape index: {}]
  %s1 = inlined_call_operand.hbm [shape: bf16[2944,128], index: 1, kind: input, shape index: {}]
  %s2 = inlined_call_operand.hbm [shape: bf16[384,128], index: 2, kind: input, shape index: {}]
  %s3 = inlined_call_operand.hbm [shape: f32[4,128], index: 3, kind: input, shape index: {}]
  %s4 = inlined_call_operand.hbm [shape: f32[2,5], index: 4, kind: output, shape index: {}]
  %s5 = sld [smem:[#allocation0]]
  $region42: #{tpu_custom_call.1} parent=0
    _
  %s7 = ssub.s32 1, %s5
  %s8 = scalar_select 0, %s7, %s5
  $region1: #{tpu_custom_call.1} parent=0
    #allocation2 [shape = 'u8[11776]{0}', space=vmem, size = 0x3000, scoped, tag = 'input window, operand 0, single buffered']
    #allocation3 [shape = 's32[1]{0}', space=sflag, size = 0x4, scoped, tag = 'scoped memory for tpu_custom_call.1']
    #allocation4 [shape = 's32[1]{0}', space=sflag, size = 0x4, scoped, tag = 'scoped memory for tpu_custom_call.1']
    #allocation5 [shape = 'u8[753664]{0}', space=vmem, size = 0xb8000, scoped, tag = 'input window, operand 1, single buffered']
    #allocation6 [shape = 's32[1]{0}', space=sflag, size = 0x4, scoped, tag = 'scoped memory for tpu_custom_call.1']
    #allocation7 [shape = 'u8[98304]{0}', space=vmem, size = 0x18000, scoped, tag = 'input window, operand 2, single buffered']
    #allocation8 [shape = 'u8[2048]{0}', space=vmem, size = 0x800, scoped, tag = 'input window, operand 3, single buffered']
    #allocation9 [shape = 's32[1]{0}', space=sflag, size = 0x4, scoped, tag = 'scoped memory for tpu_custom_call.1']
    #allocation10 [shape = 'u8[1024]{0}', space=vmem, size = 0x400, scoped, tag = 'output window, operand 0, single buffered']
    %9 = vsyncpa [#allocation3], 0
    %10 = vsyncpa [#allocation6], 0
    %11 = vsyncpa [#allocation9], 0
    %12 = vsyncpa [#allocation4], 0
    // Predicated region
    $region2: #{tpu_custom_call.1} parent=1 // pred_check
      _
    $region3: #{tpu_custom_call.1} parent=1 // pred_check_branch
      %14 = sbr.rel (0) target = $region5
    $region4: #{tpu_custom_call.1} parent=1 // pred_region
      %16 = vsyncadd [#allocation3], 0
      %s18 = sshll.u32 %s0, 4
      %s19 = int_to_ptr.hbm [resolvable:$true] %s18
      %s20 = sshll.u32 [#allocation2], 4
      %s21 = int_to_ptr.vmem [resolvable:$true] %s20
      %23 = dma.hbm_to_vmem [thread:$0]  %s19, 368, %s21, [#allocation3]
    $region5: #{tpu_custom_call.1} parent=1 // pred_fallthru
      _
    // Predicated region
    $region6: #{tpu_custom_call.1} parent=1 // pred_check
      _
    $region7: #{tpu_custom_call.1} parent=1 // pred_check_branch
      %25 = sbr.rel (0) target = $region9
    $region8: #{tpu_custom_call.1} parent=1 // pred_region
      %27 = vsyncadd [#allocation6], 0
      %s28 = sshll.u32 %s1, 4
      %s29 = int_to_ptr.hbm [resolvable:$true] %s28
      %s30 = sshll.u32 [#allocation5], 4
      %s31 = int_to_ptr.vmem [resolvable:$true] %s30
      %36 = dma.hbm_to_vmem [thread:$0]  %s29, 23552, %s31, [#allocation6], 64, 64, 4
    $region9: #{tpu_custom_call.1} parent=1 // pred_fallthru
      _
    // Predicated region
    $region10: #{tpu_custom_call.1} parent=1 // pred_check
      _
    $region11: #{tpu_custom_call.1} parent=1 // pred_check_branch
      %38 = sbr.rel (0) target = $region13
    $region12: #{tpu_custom_call.1} parent=1 // pred_region
      %40 = vsyncadd [#allocation6], 0
      %s41 = sshll.u32 %s2, 4
      %s42 = int_to_ptr.hbm [resolvable:$true] %s41
      %s43 = sshll.u32 [#allocation7], 4
      %s44 = int_to_ptr.vmem [resolvable:$true] %s43
      %49 = dma.hbm_to_vmem [thread:$0]  %s42, 3072, %s44, [#allocation6], 64, 64, 4
    $region13: #{tpu_custom_call.1} parent=1 // pred_fallthru
      _
    // Predicated region
    $region14: #{tpu_custom_call.1} parent=1 // pred_check
      _
    $region15: #{tpu_custom_call.1} parent=1 // pred_check_branch
      %51 = sbr.rel (0) target = $region17
    $region16: #{tpu_custom_call.1} parent=1 // pred_region
      %53 = vsyncadd [#allocation9], 0
      %s55 = sshll.u32 %s3, 4
      %s56 = int_to_ptr.hbm [resolvable:$true] %s55
      %s57 = sshll.u32 [#allocation8], 4
      %s58 = int_to_ptr.vmem [resolvable:$true] %s57
      %60 = dma.hbm_to_vmem [thread:$0]  %s56, 64, %s58, [#allocation9]
    $region17: #{tpu_custom_call.1} parent=1 // pred_fallthru
      _
    // Predicated region
    $region18: #{tpu_custom_call.1} parent=1 // pred_check
      _
    $region19: #{tpu_custom_call.1} parent=1 // pred_check_branch
      %62 = sbr.rel (0) target = $region21
    $region20: #{tpu_custom_call.1} parent=1 // pred_region
      %64 = dma.done [#allocation3], 368
    $region21: #{tpu_custom_call.1} parent=1 // pred_fallthru
      _
    // Predicated region
    $region22: #{tpu_custom_call.1} parent=1 // pred_check
      _
    $region23: #{tpu_custom_call.1} parent=1 // pred_check_branch
      %66 = sbr.rel (0) target = $region25
    $region24: #{tpu_custom_call.1} parent=1 // pred_region
      %68 = dma.done [#allocation6], 23552
    $region25: #{tpu_custom_call.1} parent=1 // pred_fallthru
      _
    // Predicated region
    $region26: #{tpu_custom_call.1} parent=1 // pred_check
      _
    $region27: #{tpu_custom_call.1} parent=1 // pred_check_branch
      %70 = sbr.rel (0) target = $region29
    $region28: #{tpu_custom_call.1} parent=1 // pred_region
      %72 = dma.done [#allocation6], 3072
    $region29: #{tpu_custom_call.1} parent=1 // pred_fallthru
      _
    // Predicated region
    $region30: #{tpu_custom_call.1} parent=1 // pred_check
      _
    $region31: #{tpu_custom_call.1} parent=1 // pred_check_branch
      %74 = sbr.rel (0) target = $region33
    $region32: #{tpu_custom_call.1} parent=1 // pred_region
      %76 = dma.done [#allocation9], 64
    $region33: #{tpu_custom_call.1} parent=1 // pred_fallthru
      _
    %v77 = vld [vmem:[#allocation2] sm:$0xff]
    %v78 = vld [vmem:[#allocation2 + $0x8] sm:$0xff]
    %v79 = vld [vmem:[#allocation2 + $0x10] sm:$0x7f]
    %v80 = vld [vmem:[#allocation5] sm:$0xf]
    %v81 = vld [vmem:[#allocation5 + $0x4] sm:$0xf]
    %v82 = vld [vmem:[#allocation5 + $0x8] sm:$0xf]
    %v83 = vld [vmem:[#allocation5 + $0xc] sm:$0xf]
    %v84 = vld [vmem:[#allocation5 + $0x10] sm:$0xf]
    %v85 = vld [vmem:[#allocation5 + $0x14] sm:$0xf]
    %v86 = vld [vmem:[#allocation5 + $0x18] sm:$0xf]
    %v87 = vld [vmem:[#allocation5 + $0x1c] sm:$0xf]
    %v88 = vld [vmem:[#allocation5 + $0x20] sm:$0xf]
    %v89 = vld [vmem:[#allocation5 + $0x24] sm:$0xf]
    %v90 = vld [vmem:[#allocation5 + $0x28] sm:$0xf]
    %v91 = vld [vmem:[#allocation5 + $0x2c] sm:$0xf]
    %v92 = vld [vmem:[#allocation5 + $0x30] sm:$0xf]
    %v93 = vld [vmem:[#allocation5 + $0x34] sm:$0xf]
    %v94 = vld [vmem:[#allocation5 + $0x38] sm:$0xf]
    %v95 = vld [vmem:[#allocation5 + $0x3c] sm:$0xf]
    %v96 = vld [vmem:[#allocation5 + $0x40] sm:$0xf]
    %v97 = vld [vmem:[#allocation5 + $0x44] sm:$0xf]
    %v98 = vld [vmem:[#allocation5 + $0x48] sm:$0xf]
    %v99 = vld [vmem:[#allocation5 + $0x4c] sm:$0xf]
    %v100 = vld [vmem:[#allocation5 + $0x50] sm:$0xf]
    %v101 = vld [vmem:[#allocation5 + $0x54] sm:$0xf]
    %v102 = vld [vmem:[#allocation5 + $0x58] sm:$0xf]
    %v103 = vld [vmem:[#allocation5 + $0x5c] sm:$0xf]
    %v104 = vld [vmem:[#allocation5 + $0x60] sm:$0xf]
    %v105 = vld [vmem:[#allocation5 + $0x64] sm:$0xf]
    %v106 = vld [vmem:[#allocation5 + $0x68] sm:$0xf]
    %v107 = vld [vmem:[#allocation5 + $0x6c] sm:$0xf]
    %v108 = vld [vmem:[#allocation5 + $0x70] sm:$0xf]
    %v109 = vld [vmem:[#allocation5 + $0x74] sm:$0xf]
    %v110 = vld [vmem:[#allocation5 + $0x78] sm:$0xf]
    %v111 = vld [vmem:[#allocation5 + $0x7c] sm:$0xf]
    %v112 = vld [vmem:[#allocation5 + $0x80] sm:$0xf]
    %v113 = vld [vmem:[#allocation5 + $0x84] sm:$0xf]
    %v114 = vld [vmem:[#allocation5 + $0x88] sm:$0xf]
    %v115 = vld [vmem:[#allocation5 + $0x8c] sm:$0xf]
    %v116 = vld [vmem:[#allocation5 + $0x90] sm:$0xf]
    %v117 = vld [vmem:[#allocation5 + $0x94] sm:$0xf]
    %v118 = vld [vmem:[#allocation5 + $0x98] sm:$0xf]
    %v119 = vld [vmem:[#allocation5 + $0x9c] sm:$0xf]
    %v120 = vld [vmem:[#allocation5 + $0xa0] sm:$0xf]
    %v121 = vld [vmem:[#allocation5 + $0xa4] sm:$0xf]
    %v122 = vld [vmem:[#allocation5 + $0xa8] sm:$0xf]
    %v123 = vld [vmem:[#allocation5 + $0xac] sm:$0xf]
    %v124 = vld [vmem:[#allocation5 + $0xb0] sm:$0xf]
    %v125 = vld [vmem:[#allocation5 + $0xb4] sm:$0xf]
    %v126 = vld [vmem:[#allocation5 + $0xb8] sm:$0xf]
    %v127 = vld [vmem:[#allocation5 + $0xbc] sm:$0xf]
    %v128 = vld [vmem:[#allocation5 + $0xc0] sm:$0xf]
    %v129 = vld [vmem:[#allocation5 + $0xc4] sm:$0xf]
    %v130 = vld [vmem:[#allocation5 + $0xc8] sm:$0xf]
    %v131 = vld [vmem:[#allocation5 + $0xcc] sm:$0xf]
    %v132 = vld [vmem:[#allocation5 + $0xd0] sm:$0xf]
    %v133 = vld [vmem:[#allocation5 + $0xd4] sm:$0xf]
    %v134 = vld [vmem:[#allocation5 + $0xd8] sm:$0xf]
    %v135 = vld [vmem:[#allocation5 + $0xdc] sm:$0xf]
    %v136 = vld [vmem:[#allocation5 + $0xe0] sm:$0xf]
    %v137 = vld [vmem:[#allocation5 + $0xe4] sm:$0xf]
    %v138 = vld [vmem:[#allocation5 + $0xe8] sm:$0xf]
    %v139 = vld [vmem:[#allocation5 + $0xec] sm:$0xf]
    %v140 = vld [vmem:[#allocation5 + $0xf0] sm:$0xf]
    %v141 = vld [vmem:[#allocation5 + $0xf4] sm:$0xf]
    %v142 = vld [vmem:[#allocation5 + $0xf8] sm:$0xf]
    %v143 = vld [vmem:[#allocation5 + $0xfc] sm:$0xf]
    %v144 = vld [vmem:[#allocation5 + $0x100] sm:$0xf]
    %v145 = vld [vmem:[#allocation5 + $0x104] sm:$0xf]
    %v146 = vld [vmem:[#allocation5 + $0x108] sm:$0xf]
    %v147 = vld [vmem:[#allocation5 + $0x10c] sm:$0xf]
    %v148 = vld [vmem:[#allocation5 + $0x110] sm:$0xf]
    %v149 = vld [vmem:[#allocation5 + $0x114] sm:$0xf]
    %v150 = vld [vmem:[#allocation5 + $0x118] sm:$0xf]
    %v151 = vld [vmem:[#allocation5 + $0x11c] sm:$0xf]
    %v152 = vld [vmem:[#allocation5 + $0x120] sm:$0xf]
    %v153 = vld [vmem:[#allocation5 + $0x124] sm:$0xf]
    %v154 = vld [vmem:[#allocation5 + $0x128] sm:$0xf]
    %v155 = vld [vmem:[#allocation5 + $0x12c] sm:$0xf]
    %v156 = vld [vmem:[#allocation5 + $0x130] sm:$0xf]
    %v157 = vld [vmem:[#allocation5 + $0x134] sm:$0xf]
    %v158 = vld [vmem:[#allocation5 + $0x138] sm:$0xf]
    %v159 = vld [vmem:[#allocation5 + $0x13c] sm:$0xf]
    %v160 = vld [vmem:[#allocation5 + $0x140] sm:$0xf]
    %v161 = vld [vmem:[#allocation5 + $0x144] sm:$0xf]
    %v162 = vld [vmem:[#allocation5 + $0x148] sm:$0xf]
    %v163 = vld [vmem:[#allocation5 + $0x14c] sm:$0xf]
    %v164 = vld [vmem:[#allocation5 + $0x150] sm:$0xf]
    %v165 = vld [vmem:[#allocation5 + $0x154] sm:$0xf]
    %v166 = vld [vmem:[#allocation5 + $0x158] sm:$0xf]
    %v167 = vld [vmem:[#allocation5 + $0x15c] sm:$0xf]
    %v168 = vld [vmem:[#allocation5 + $0x160] sm:$0xf]
    %v169 = vld [vmem:[#allocation5 + $0x164] sm:$0xf]
    %v170 = vld [vmem:[#allocation5 + $0x168] sm:$0xf]
    %v171 = vld [vmem:[#allocation5 + $0x16c] sm:$0xf]
    %v172 = vld [vmem:[#allocation5 + $0x170] sm:$0xf]
    %v173 = vld [vmem:[#allocation5 + $0x174] sm:$0xf]
    %v174 = vld [vmem:[#allocation5 + $0x178] sm:$0xf]
    %v175 = vld [vmem:[#allocation5 + $0x17c] sm:$0xf]
    %v176 = vld [vmem:[#allocation5 + $0x180] sm:$0xf]
    %v177 = vld [vmem:[#allocation5 + $0x184] sm:$0xf]
    %v178 = vld [vmem:[#allocation5 + $0x188] sm:$0xf]
    %v179 = vld [vmem:[#allocation5 + $0x18c] sm:$0xf]
    %v180 = vld [vmem:[#allocation5 + $0x190] sm:$0xf]
    %v181 = vld [vmem:[#allocation5 + $0x194] sm:$0xf]
    %v182 = vld [vmem:[#allocation5 + $0x198] sm:$0xf]
    %v183 = vld [vmem:[#allocation5 + $0x19c] sm:$0xf]
    %v184 = vld [vmem:[#allocation5 + $0x1a0] sm:$0xf]
    %v185 = vld [vmem:[#allocation5 + $0x1a4] sm:$0xf]
    %v186 = vld [vmem:[#allocation5 + $0x1a8] sm:$0xf]
    %v187 = vld [vmem:[#allocation5 + $0x1ac] sm:$0xf]
    %v188 = vld [vmem:[#allocation5 + $0x1b0] sm:$0xf]
    %v189 = vld [vmem:[#allocation5 + $0x1b4] sm:$0xf]
    %v190 = vld [vmem:[#allocation5 + $0x1b8] sm:$0xf]
    %v191 = vld [vmem:[#allocation5 + $0x1bc] sm:$0xf]
    %v192 = vld [vmem:[#allocation5 + $0x1c0] sm:$0xf]
    %v193 = vld [vmem:[#allocation5 + $0x1c4] sm:$0xf]
    %v194 = vld [vmem:[#allocation5 + $0x1c8] sm:$0xf]
    %v195 = vld [vmem:[#allocation5 + $0x1cc] sm:$0xf]
    %v196 = vld [vmem:[#allocation5 + $0x1d0] sm:$0xf]
    %v197 = vld [vmem:[#allocation5 + $0x1d4] sm:$0xf]
    %v198 = vld [vmem:[#allocation5 + $0x1d8] sm:$0xf]
    %v199 = vld [vmem:[#allocation5 + $0x1dc] sm:$0xf]
    %v200 = vld [vmem:[#allocation5 + $0x1e0] sm:$0xf]
    %v201 = vld [vmem:[#allocation5 + $0x1e4] sm:$0xf]
    %v202 = vld [vmem:[#allocation5 + $0x1e8] sm:$0xf]
    %v203 = vld [vmem:[#allocation5 + $0x1ec] sm:$0xf]
    %v204 = vld [vmem:[#allocation5 + $0x1f0] sm:$0xf]
    %v205 = vld [vmem:[#allocation5 + $0x1f4] sm:$0xf]
    %v206 = vld [vmem:[#allocation5 + $0x1f8] sm:$0xf]
    %v207 = vld [vmem:[#allocation5 + $0x1fc] sm:$0xf]
    %v208 = vld [vmem:[#allocation5 + $0x200] sm:$0xf]
    %v209 = vld [vmem:[#allocation5 + $0x204] sm:$0xf]
    %v210 = vld [vmem:[#allocation5 + $0x208] sm:$0xf]
    %v211 = vld [vmem:[#allocation5 + $0x20c] sm:$0xf]
    %v212 = vld [vmem:[#allocation5 + $0x210] sm:$0xf]
    %v213 = vld [vmem:[#allocation5 + $0x214] sm:$0xf]
    %v214 = vld [vmem:[#allocation5 + $0x218] sm:$0xf]
    %v215 = vld [vmem:[#allocation5 + $0x21c] sm:$0xf]
    %v216 = vld [vmem:[#allocation5 + $0x220] sm:$0xf]
    %v217 = vld [vmem:[#allocation5 + $0x224] sm:$0xf]
    %v218 = vld [vmem:[#allocation5 + $0x228] sm:$0xf]
    %v219 = vld [vmem:[#allocation5 + $0x22c] sm:$0xf]
    %v220 = vld [vmem:[#allocation5 + $0x230] sm:$0xf]
    %v221 = vld [vmem:[#allocation5 + $0x234] sm:$0xf]
    %v222 = vld [vmem:[#allocation5 + $0x238] sm:$0xf]
    %v223 = vld [vmem:[#allocation5 + $0x23c] sm:$0xf]
    %v224 = vld [vmem:[#allocation5 + $0x240] sm:$0xf]
    %v225 = vld [vmem:[#allocation5 + $0x244] sm:$0xf]
    %v226 = vld [vmem:[#allocation5 + $0x248] sm:$0xf]
    %v227 = vld [vmem:[#allocation5 + $0x24c] sm:$0xf]
    %v228 = vld [vmem:[#allocation5 + $0x250] sm:$0xf]
    %v229 = vld [vmem:[#allocation5 + $0x254] sm:$0xf]
    %v230 = vld [vmem:[#allocation5 + $0x258] sm:$0xf]
    %v231 = vld [vmem:[#allocation5 + $0x25c] sm:$0xf]
    %v232 = vld [vmem:[#allocation5 + $0x260] sm:$0xf]
    %v233 = vld [vmem:[#allocation5 + $0x264] sm:$0xf]
    %v234 = vld [vmem:[#allocation5 + $0x268] sm:$0xf]
    %v235 = vld [vmem:[#allocation5 + $0x26c] sm:$0xf]
    %v236 = vld [vmem:[#allocation5 + $0x270] sm:$0xf]
    %v237 = vld [vmem:[#allocation5 + $0x274] sm:$0xf]
    %v238 = vld [vmem:[#allocation5 + $0x278] sm:$0xf]
    %v239 = vld [vmem:[#allocation5 + $0x27c] sm:$0xf]
    %v240 = vld [vmem:[#allocation5 + $0x280] sm:$0xf]
    %v241 = vld [vmem:[#allocation5 + $0x284] sm:$0xf]
    %v242 = vld [vmem:[#allocation5 + $0x288] sm:$0xf]
    %v243 = vld [vmem:[#allocation5 + $0x28c] sm:$0xf]
    %v244 = vld [vmem:[#allocation5 + $0x290] sm:$0xf]
    %v245 = vld [vmem:[#allocation5 + $0x294] sm:$0xf]
    %v246 = vld [vmem:[#allocation5 + $0x298] sm:$0xf]
    %v247 = vld [vmem:[#allocation5 + $0x29c] sm:$0xf]
    %v248 = vld [vmem:[#allocation5 + $0x2a0] sm:$0xf]
    %v249 = vld [vmem:[#allocation5 + $0x2a4] sm:$0xf]
    %v250 = vld [vmem:[#allocation5 + $0x2a8] sm:$0xf]
    %v251 = vld [vmem:[#allocation5 + $0x2ac] sm:$0xf]
    %v252 = vld [vmem:[#allocation5 + $0x2b0] sm:$0xf]
    %v253 = vld [vmem:[#allocation5 + $0x2b4] sm:$0xf]
    %v254 = vld [vmem:[#allocation5 + $0x2b8] sm:$0xf]
    %v255 = vld [vmem:[#allocation5 + $0x2bc] sm:$0xf]
    %v256 = vld [vmem:[#allocation5 + $0x2c0] sm:$0xf]
    %v257 = vld [vmem:[#allocation5 + $0x2c4] sm:$0xf]
    %v258 = vld [vmem:[#allocation5 + $0x2c8] sm:$0xf]
    %v259 = vld [vmem:[#allocation5 + $0x2cc] sm:$0xf]
    %v260 = vld [vmem:[#allocation5 + $0x2d0] sm:$0xf]
    %v261 = vld [vmem:[#allocation5 + $0x2d4] sm:$0xf]
    %v262 = vld [vmem:[#allocation5 + $0x2d8] sm:$0xf]
    %v263 = vld [vmem:[#allocation5 + $0x2dc] sm:$0xf]
    %v264 = vld [vmem:[#allocation5 + $0x2e0] sm:$0xf]
    %v265 = vld [vmem:[#allocation5 + $0x2e4] sm:$0xf]
    %v266 = vld [vmem:[#allocation5 + $0x2e8] sm:$0xf]
    %v267 = vld [vmem:[#allocation5 + $0x2ec] sm:$0xf]
    %v268 = vld [vmem:[#allocation5 + $0x2f0] sm:$0xf]
    %v269 = vld [vmem:[#allocation5 + $0x2f4] sm:$0xf]
    %v270 = vld [vmem:[#allocation5 + $0x2f8] sm:$0xf]
    %v271 = vld [vmem:[#allocation5 + $0x2fc] sm:$0xf]
    %v272 = vld [vmem:[#allocation5 + $0x300] sm:$0xf]
    %v273 = vld [vmem:[#allocation5 + $0x304] sm:$0xf]
    %v274 = vld [vmem:[#allocation5 + $0x308] sm:$0xf]
    %v275 = vld [vmem:[#allocation5 + $0x30c] sm:$0xf]
    %v276 = vld [vmem:[#allocation5 + $0x310] sm:$0xf]
    %v277 = vld [vmem:[#allocation5 + $0x314] sm:$0xf]
    %v278 = vld [vmem:[#allocation5 + $0x318] sm:$0xf]
    %v279 = vld [vmem:[#allocation5 + $0x31c] sm:$0xf]
    %v280 = vld [vmem:[#allocation5 + $0x320] sm:$0xf]
    %v281 = vld [vmem:[#allocation5 + $0x324] sm:$0xf]
    %v282 = vld [vmem:[#allocation5 + $0x328] sm:$0xf]
    %v283 = vld [vmem:[#allocation5 + $0x32c] sm:$0xf]
    %v284 = vld [vmem:[#allocation5 + $0x330] sm:$0xf]
    %v285 = vld [vmem:[#allocation5 + $0x334] sm:$0xf]
    %v286 = vld [vmem:[#allocation5 + $0x338] sm:$0xf]
    %v287 = vld [vmem:[#allocation5 + $0x33c] sm:$0xf]
    %v288 = vld [vmem:[#allocation5 + $0x340] sm:$0xf]
    %v289 = vld [vmem:[#allocation5 + $0x344] sm:$0xf]
    %v290 = vld [vmem:[#allocation5 + $0x348] sm:$0xf]
    %v291 = vld [vmem:[#allocation5 + $0x34c] sm:$0xf]
    %v292 = vld [vmem:[#allocation5 + $0x350] sm:$0xf]
    %v293 = vld [vmem:[#allocation5 + $0x354] sm:$0xf]
    %v294 = vld [vmem:[#allocation5 + $0x358] sm:$0xf]
    %v295 = vld [vmem:[#allocation5 + $0x35c] sm:$0xf]
    %v296 = vld [vmem:[#allocation5 + $0x360] sm:$0xf]
    %v297 = vld [vmem:[#allocation5 + $0x364] sm:$0xf]
    %v298 = vld [vmem:[#allocation5 + $0x368] sm:$0xf]
    %v299 = vld [vmem:[#allocation5 + $0x36c] sm:$0xf]
    %v300 = vld [vmem:[#allocation5 + $0x370] sm:$0xf]
    %v301 = vld [vmem:[#allocation5 + $0x374] sm:$0xf]
    %v302 = vld [vmem:[#allocation5 + $0x378] sm:$0xf]
    %v303 = vld [vmem:[#allocation5 + $0x37c] sm:$0xf]
    %v304 = vld [vmem:[#allocation5 + $0x380] sm:$0xf]
    %v305 = vld [vmem:[#allocation5 + $0x384] sm:$0xf]
    %v306 = vld [vmem:[#allocation5 + $0x388] sm:$0xf]
    %v307 = vld [vmem:[#allocation5 + $0x38c] sm:$0xf]
    %v308 = vld [vmem:[#allocation5 + $0x390] sm:$0xf]
    %v309 = vld [vmem:[#allocation5 + $0x394] sm:$0xf]
    %v310 = vld [vmem:[#allocation5 + $0x398] sm:$0xf]
    %v311 = vld [vmem:[#allocation5 + $0x39c] sm:$0xf]
    %v312 = vld [vmem:[#allocation5 + $0x3a0] sm:$0xf]
    %v313 = vld [vmem:[#allocation5 + $0x3a4] sm:$0xf]
    %v314 = vld [vmem:[#allocation5 + $0x3a8] sm:$0xf]
    %v315 = vld [vmem:[#allocation5 + $0x3ac] sm:$0xf]
    %v316 = vld [vmem:[#allocation5 + $0x3b0] sm:$0xf]
    %v317 = vld [vmem:[#allocation5 + $0x3b4] sm:$0xf]
    %v318 = vld [vmem:[#allocation5 + $0x3b8] sm:$0xf]
    %v319 = vld [vmem:[#allocation5 + $0x3bc] sm:$0xf]
    %v320 = vld [vmem:[#allocation5 + $0x3c0] sm:$0xf]
    %v321 = vld [vmem:[#allocation5 + $0x3c4] sm:$0xf]
    %v322 = vld [vmem:[#allocation5 + $0x3c8] sm:$0xf]
    %v323 = vld [vmem:[#allocation5 + $0x3cc] sm:$0xf]
    %v324 = vld [vmem:[#allocation5 + $0x3d0] sm:$0xf]
    %v325 = vld [vmem:[#allocation5 + $0x3d4] sm:$0xf]
    %v326 = vld [vmem:[#allocation5 + $0x3d8] sm:$0xf]
    %v327 = vld [vmem:[#allocation5 + $0x3dc] sm:$0xf]
    %v328 = vld [vmem:[#allocation5 + $0x3e0] sm:$0xf]
    %v329 = vld [vmem:[#allocation5 + $0x3e4] sm:$0xf]
    %v330 = vld [vmem:[#allocation5 + $0x3e8] sm:$0xf]
    %v331 = vld [vmem:[#allocation5 + $0x3ec] sm:$0xf]
    %v332 = vld [vmem:[#allocation5 + $0x3f0] sm:$0xf]
    %v333 = vld [vmem:[#allocation5 + $0x3f4] sm:$0xf]
    %v334 = vld [vmem:[#allocation5 + $0x3f8] sm:$0xf]
    %v335 = vld [vmem:[#allocation5 + $0x3fc] sm:$0xf]
    %v336 = vld [vmem:[#allocation5 + $0x400] sm:$0xf]
    %v337 = vld [vmem:[#allocation5 + $0x404] sm:$0xf]
    %v338 = vld [vmem:[#allocation5 + $0x408] sm:$0xf]
    %v339 = vld [vmem:[#allocation5 + $0x40c] sm:$0xf]
    %v340 = vld [vmem:[#allocation5 + $0x410] sm:$0xf]
    %v341 = vld [vmem:[#allocation5 + $0x414] sm:$0xf]
    %v342 = vld [vmem:[#allocation5 + $0x418] sm:$0xf]
    %v343 = vld [vmem:[#allocation5 + $0x41c] sm:$0xf]
    %v344 = vld [vmem:[#allocation5 + $0x420] sm:$0xf]
    %v345 = vld [vmem:[#allocation5 + $0x424] sm:$0xf]
    %v346 = vld [vmem:[#allocation5 + $0x428] sm:$0xf]
    %v347 = vld [vmem:[#allocation5 + $0x42c] sm:$0xf]
    %v348 = vld [vmem:[#allocation5 + $0x430] sm:$0xf]
    %v349 = vld [vmem:[#allocation5 + $0x434] sm:$0xf]
    %v350 = vld [vmem:[#allocation5 + $0x438] sm:$0xf]
    %v351 = vld [vmem:[#allocation5 + $0x43c] sm:$0xf]
    %v352 = vld [vmem:[#allocation5 + $0x440] sm:$0xf]
    %v353 = vld [vmem:[#allocation5 + $0x444] sm:$0xf]
    %v354 = vld [vmem:[#allocation5 + $0x448] sm:$0xf]
    %v355 = vld [vmem:[#allocation5 + $0x44c] sm:$0xf]
    %v356 = vld [vmem:[#allocation5 + $0x450] sm:$0xf]
    %v357 = vld [vmem:[#allocation5 + $0x454] sm:$0xf]
    %v358 = vld [vmem:[#allocation5 + $0x458] sm:$0xf]
    %v359 = vld [vmem:[#allocation5 + $0x45c] sm:$0xf]
    %v360 = vld [vmem:[#allocation5 + $0x460] sm:$0xf]
    %v361 = vld [vmem:[#allocation5 + $0x464] sm:$0xf]
    %v362 = vld [vmem:[#allocation5 + $0x468] sm:$0xf]
    %v363 = vld [vmem:[#allocation5 + $0x46c] sm:$0xf]
    %v364 = vld [vmem:[#allocation5 + $0x470] sm:$0xf]
    %v365 = vld [vmem:[#allocation5 + $0x474] sm:$0xf]
    %v366 = vld [vmem:[#allocation5 + $0x478] sm:$0xf]
    %v367 = vld [vmem:[#allocation5 + $0x47c] sm:$0xf]
    %v368 = vld [vmem:[#allocation5 + $0x480] sm:$0xf]
    %v369 = vld [vmem:[#allocation5 + $0x484] sm:$0xf]
    %v370 = vld [vmem:[#allocation5 + $0x488] sm:$0xf]
    %v371 = vld [vmem:[#allocation5 + $0x48c] sm:$0xf]
    %v372 = vld [vmem:[#allocation5 + $0x490] sm:$0xf]
    %v373 = vld [vmem:[#allocation5 + $0x494] sm:$0xf]
    %v374 = vld [vmem:[#allocation5 + $0x498] sm:$0xf]
    %v375 = vld [vmem:[#allocation5 + $0x49c] sm:$0xf]
    %v376 = vld [vmem:[#allocation5 + $0x4a0] sm:$0xf]
    %v377 = vld [vmem:[#allocation5 + $0x4a4] sm:$0xf]
    %v378 = vld [vmem:[#allocation5 + $0x4a8] sm:$0xf]
    %v379 = vld [vmem:[#allocation5 + $0x4ac] sm:$0xf]
    %v380 = vld [vmem:[#allocation5 + $0x4b0] sm:$0xf]
    %v381 = vld [vmem:[#allocation5 + $0x4b4] sm:$0xf]
    %v382 = vld [vmem:[#allocation5 + $0x4b8] sm:$0xf]
    %v383 = vld [vmem:[#allocation5 + $0x4bc] sm:$0xf]
    %v384 = vld [vmem:[#allocation5 + $0x4c0] sm:$0xf]
    %v385 = vld [vmem:[#allocation5 + $0x4c4] sm:$0xf]
    %v386 = vld [vmem:[#allocation5 + $0x4c8] sm:$0xf]
    %v387 = vld [vmem:[#allocation5 + $0x4cc] sm:$0xf]
    %v388 = vld [vmem:[#allocation5 + $0x4d0] sm:$0xf]
    %v389 = vld [vmem:[#allocation5 + $0x4d4] sm:$0xf]
    %v390 = vld [vmem:[#allocation5 + $0x4d8] sm:$0xf]
    %v391 = vld [vmem:[#allocation5 + $0x4dc] sm:$0xf]
    %v392 = vld [vmem:[#allocation5 + $0x4e0] sm:$0xf]
    %v393 = vld [vmem:[#allocation5 + $0x4e4] sm:$0xf]
    %v394 = vld [vmem:[#allocation5 + $0x4e8] sm:$0xf]
    %v395 = vld [vmem:[#allocation5 + $0x4ec] sm:$0xf]
    %v396 = vld [vmem:[#allocation5 + $0x4f0] sm:$0xf]
    %v397 = vld [vmem:[#allocation5 + $0x4f4] sm:$0xf]
    %v398 = vld [vmem:[#allocation5 + $0x4f8] sm:$0xf]
    %v399 = vld [vmem:[#allocation5 + $0x4fc] sm:$0xf]
    %v400 = vld [vmem:[#allocation5 + $0x500] sm:$0xf]
    %v401 = vld [vmem:[#allocation5 + $0x504] sm:$0xf]
    %v402 = vld [vmem:[#allocation5 + $0x508] sm:$0xf]
    %v403 = vld [vmem:[#allocation5 + $0x50c] sm:$0xf]
    %v404 = vld [vmem:[#allocation5 + $0x510] sm:$0xf]
    %v405 = vld [vmem:[#allocation5 + $0x514] sm:$0xf]
    %v406 = vld [vmem:[#allocation5 + $0x518] sm:$0xf]
    %v407 = vld [vmem:[#allocation5 + $0x51c] sm:$0xf]
    %v408 = vld [vmem:[#allocation5 + $0x520] sm:$0xf]
    %v409 = vld [vmem:[#allocation5 + $0x524] sm:$0xf]
    %v410 = vld [vmem:[#allocation5 + $0x528] sm:$0xf]
    %v411 = vld [vmem:[#allocation5 + $0x52c] sm:$0xf]
    %v412 = vld [vmem:[#allocation5 + $0x530] sm:$0xf]
    %v413 = vld [vmem:[#allocation5 + $0x534] sm:$0xf]
    %v414 = vld [vmem:[#allocation5 + $0x538] sm:$0xf]
    %v415 = vld [vmem:[#allocation5 + $0x53c] sm:$0xf]
    %v416 = vld [vmem:[#allocation5 + $0x540] sm:$0xf]
    %v417 = vld [vmem:[#allocation5 + $0x544] sm:$0xf]
    %v418 = vld [vmem:[#allocation5 + $0x548] sm:$0xf]
    %v419 = vld [vmem:[#allocation5 + $0x54c] sm:$0xf]
    %v420 = vld [vmem:[#allocation5 + $0x550] sm:$0xf]
    %v421 = vld [vmem:[#allocation5 + $0x554] sm:$0xf]
    %v422 = vld [vmem:[#allocation5 + $0x558] sm:$0xf]
    %v423 = vld [vmem:[#allocation5 + $0x55c] sm:$0xf]
    %v424 = vld [vmem:[#allocation5 + $0x560] sm:$0xf]
    %v425 = vld [vmem:[#allocation5 + $0x564] sm:$0xf]
    %v426 = vld [vmem:[#allocation5 + $0x568] sm:$0xf]
    %v427 = vld [vmem:[#allocation5 + $0x56c] sm:$0xf]
    %v428 = vld [vmem:[#allocation5 + $0x570] sm:$0xf]
    %v429 = vld [vmem:[#allocation5 + $0x574] sm:$0xf]
    %v430 = vld [vmem:[#allocation5 + $0x578] sm:$0xf]
    %v431 = vld [vmem:[#allocation5 + $0x57c] sm:$0xf]
    %v432 = vld [vmem:[#allocation5 + $0x580] sm:$0xf]
    %v433 = vld [vmem:[#allocation5 + $0x584] sm:$0xf]
    %v434 = vld [vmem:[#allocation5 + $0x588] sm:$0xf]
    %v435 = vld [vmem:[#allocation5 + $0x58c] sm:$0xf]
    %v436 = vld [vmem:[#allocation5 + $0x590] sm:$0xf]
    %v437 = vld [vmem:[#allocation5 + $0x594] sm:$0xf]
    %v438 = vld [vmem:[#allocation5 + $0x598] sm:$0xf]
    %v439 = vld [vmem:[#allocation5 + $0x59c] sm:$0xf]
    %v440 = vld [vmem:[#allocation5 + $0x5a0] sm:$0xf]
    %v441 = vld [vmem:[#allocation5 + $0x5a4] sm:$0xf]
    %v442 = vld [vmem:[#allocation5 + $0x5a8] sm:$0xf]
    %v443 = vld [vmem:[#allocation5 + $0x5ac] sm:$0xf]
    %v444 = vld [vmem:[#allocation5 + $0x5b0] sm:$0xf]
    %v445 = vld [vmem:[#allocation5 + $0x5b4] sm:$0xf]
    %v446 = vld [vmem:[#allocation5 + $0x5b8] sm:$0xf]
    %v447 = vld [vmem:[#allocation5 + $0x5bc] sm:$0xf]
    %v448 = vld [vmem:[#allocation8] sm:$0x1]
    %v449 = vperm.slane %v448, 0
    %451 = vst [vmem:[#allocation1] ss:$9 sm:$0xff] %v77
    %v452 = vld [vmem:[#allocation1] sm:$0xff]
    %v453 = vld [vmem:[#allocation1 + $0x9] sm:$0xff]
    %v454 = vld [vmem:[#allocation1 + $0x12] sm:$0xff]
    %v455 = vld [vmem:[#allocation1 + $0x1b] sm:$0xff]
    %v456 = vld [vmem:[#allocation1 + $0x24] sm:$0xff]
    %v457 = vld [vmem:[#allocation1 + $0x2d] sm:$0xff]
    %v458 = vld [vmem:[#allocation1 + $0x36] sm:$0xff]
    %v459 = vld [vmem:[#allocation1 + $0x3f] sm:$0xff]
    %461 = vst [vmem:[#allocation1] ss:$9 sm:$0xff] %v78
    %v462 = vld [vmem:[#allocation1] sm:$0xff]
    %v463 = vld [vmem:[#allocation1 + $0x9] sm:$0xff]
    %v464 = vld [vmem:[#allocation1 + $0x12] sm:$0xff]
    %v465 = vld [vmem:[#allocation1 + $0x1b] sm:$0xff]
    %v466 = vld [vmem:[#allocation1 + $0x24] sm:$0xff]
    %v467 = vld [vmem:[#allocation1 + $0x2d] sm:$0xff]
    %v468 = vld [vmem:[#allocation1 + $0x36] sm:$0xff]
    %v469 = vld [vmem:[#allocation1 + $0x3f] sm:$0xff]
    %471 = vst [vmem:[#allocation1] ss:$9 sm:$0xff] %v79
    %v472 = vld [vmem:[#allocation1] sm:$0xff]
    %v473 = vld [vmem:[#allocation1 + $0x9] sm:$0xff]
    %v474 = vld [vmem:[#allocation1 + $0x12] sm:$0xff]
    %v475 = vld [vmem:[#allocation1 + $0x1b] sm:$0xff]
    %v476 = vld [vmem:[#allocation1 + $0x24] sm:$0xff]
    %v477 = vld [vmem:[#allocation1 + $0x2d] sm:$0xff]
    %v478 = vld [vmem:[#allocation1 + $0x36] sm:$0xff]
    %v870 = vunpack.c.l.b16 %v80
    %v871 = vunpack.c.l.b16 %v81
    %v872 = vunpack.c.l.b16 %v82
    %v873 = vunpack.c.l.b16 %v83
    %v874 = vunpack.c.l.b16 %v84
    %v875 = vunpack.c.l.b16 %v85
    %v876 = vunpack.c.l.b16 %v86
    %v877 = vunpack.c.l.b16 %v87
    %v878 = vunpack.c.l.b16 %v88
    %v879 = vunpack.c.l.b16 %v89
    %v880 = vunpack.c.l.b16 %v90
    %v881 = vunpack.c.l.b16 %v91
    %v882 = vunpack.c.l.b16 %v92
    %v883 = vunpack.c.l.b16 %v93
    %v884 = vunpack.c.l.b16 %v94
    %v885 = vunpack.c.l.b16 %v95
    %v886 = vunpack.c.l.b16 %v96
    %v887 = vunpack.c.l.b16 %v97
    %v888 = vunpack.c.l.b16 %v98
    %v889 = vunpack.c.l.b16 %v99
    %v890 = vunpack.c.l.b16 %v100
    %v891 = vunpack.c.l.b16 %v101
    %v892 = vunpack.c.l.b16 %v102
    %v893 = vunpack.c.l.b16 %v103
    %v894 = vunpack.c.l.b16 %v104
    %v895 = vunpack.c.l.b16 %v105
    %v896 = vunpack.c.l.b16 %v106
    %v897 = vunpack.c.l.b16 %v107
    %v898 = vunpack.c.l.b16 %v108
    %v899 = vunpack.c.l.b16 %v109
    %v900 = vunpack.c.l.b16 %v110
    %v901 = vunpack.c.l.b16 %v111
    %v902 = vunpack.c.l.b16 %v112
    %v903 = vunpack.c.l.b16 %v113
    %v904 = vunpack.c.l.b16 %v114
    %v905 = vunpack.c.l.b16 %v115
    %v906 = vunpack.c.l.b16 %v116
    %v907 = vunpack.c.l.b16 %v117
    %v908 = vunpack.c.l.b16 %v118
    %v909 = vunpack.c.l.b16 %v119
    %v910 = vunpack.c.l.b16 %v120
    %v911 = vunpack.c.l.b16 %v121
    %v912 = vunpack.c.l.b16 %v122
    %v913 = vunpack.c.l.b16 %v123
    %v914 = vunpack.c.l.b16 %v124
    %v915 = vunpack.c.l.b16 %v125
    %v916 = vunpack.c.l.b16 %v126
    %v917 = vunpack.c.l.b16 %v127
    %v918 = vunpack.c.l.b16 %v128
    %v919 = vunpack.c.l.b16 %v129
    %v920 = vunpack.c.l.b16 %v130
    %v921 = vunpack.c.l.b16 %v131
    %v922 = vunpack.c.l.b16 %v132
    %v923 = vunpack.c.l.b16 %v133
    %v924 = vunpack.c.l.b16 %v134
    %v925 = vunpack.c.l.b16 %v135
    %v926 = vunpack.c.l.b16 %v136
    %v927 = vunpack.c.l.b16 %v137
    %v928 = vunpack.c.l.b16 %v138
    %v929 = vunpack.c.l.b16 %v139
    %v930 = vunpack.c.l.b16 %v140
    %v931 = vunpack.c.l.b16 %v141
    %v932 = vunpack.c.l.b16 %v142
    %v933 = vunpack.c.l.b16 %v143
    %v934 = vunpack.c.l.b16 %v144
    %v935 = vunpack.c.l.b16 %v145
    %v936 = vunpack.c.l.b16 %v146
    %v937 = vunpack.c.l.b16 %v147
    %v938 = vunpack.c.l.b16 %v148
    %v939 = vunpack.c.l.b16 %v149
    %v940 = vunpack.c.l.b16 %v150
    %v941 = vunpack.c.l.b16 %v151
    %v942 = vunpack.c.l.b16 %v152
    %v943 = vunpack.c.l.b16 %v153
    %v944 = vunpack.c.l.b16 %v154
    %v945 = vunpack.c.l.b16 %v155
    %v946 = vunpack.c.l.b16 %v156
    %v947 = vunpack.c.l.b16 %v157
    %v948 = vunpack.c.l.b16 %v158
    %v949 = vunpack.c.l.b16 %v159
    %v950 = vunpack.c.l.b16 %v160
    %v951 = vunpack.c.l.b16 %v161
    %v952 = vunpack.c.l.b16 %v162
    %v953 = vunpack.c.l.b16 %v163
    %v954 = vunpack.c.l.b16 %v164
    %v955 = vunpack.c.l.b16 %v165
    %v956 = vunpack.c.l.b16 %v166
    %v957 = vunpack.c.l.b16 %v167
    %v958 = vunpack.c.l.b16 %v168
    %v959 = vunpack.c.l.b16 %v169
    %v960 = vunpack.c.l.b16 %v170
    %v961 = vunpack.c.l.b16 %v171
    %v962 = vunpack.c.l.b16 %v172
    %v963 = vunpack.c.l.b16 %v173
    %v964 = vunpack.c.l.b16 %v174
    %v965 = vunpack.c.l.b16 %v175
    %v966 = vunpack.c.l.b16 %v176
    %v967 = vunpack.c.l.b16 %v177
    %v968 = vunpack.c.l.b16 %v178
    %v969 = vunpack.c.l.b16 %v179
    %v970 = vunpack.c.l.b16 %v180
    %v971 = vunpack.c.l.b16 %v181
    %v972 = vunpack.c.l.b16 %v182
    %v973 = vunpack.c.l.b16 %v183
    %v974 = vunpack.c.l.b16 %v184
    %v975 = vunpack.c.l.b16 %v185
    %v976 = vunpack.c.l.b16 %v186
    %v977 = vunpack.c.l.b16 %v187
    %v978 = vunpack.c.l.b16 %v188
    %v979 = vunpack.c.l.b16 %v189
    %v980 = vunpack.c.l.b16 %v190
    %v981 = vunpack.c.l.b16 %v191
    %v982 = vunpack.c.l.b16 %v192
    %v983 = vunpack.c.l.b16 %v193
    %v984 = vunpack.c.l.b16 %v194
    %v985 = vunpack.c.l.b16 %v195
    %v986 = vunpack.c.l.b16 %v196
    %v987 = vunpack.c.l.b16 %v197
    %v988 = vunpack.c.l.b16 %v198
    %v989 = vunpack.c.l.b16 %v199
    %v990 = vunpack.c.l.b16 %v200
    %v991 = vunpack.c.l.b16 %v201
    %v992 = vunpack.c.l.b16 %v202
    %v993 = vunpack.c.l.b16 %v203
    %v994 = vunpack.c.l.b16 %v204
    %v995 = vunpack.c.l.b16 %v205
    %v996 = vunpack.c.l.b16 %v206
    %v997 = vunpack.c.l.b16 %v207
    %v998 = vunpack.c.l.b16 %v208
    %v999 = vunpack.c.l.b16 %v209
    %v1000 = vunpack.c.l.b16 %v210
    %v1001 = vunpack.c.l.b16 %v211
    %v1002 = vunpack.c.l.b16 %v212
    %v1003 = vunpack.c.l.b16 %v213
    %v1004 = vunpack.c.l.b16 %v214
    %v1005 = vunpack.c.l.b16 %v215
    %v1006 = vunpack.c.l.b16 %v216
    %v1007 = vunpack.c.l.b16 %v217
    %v1008 = vunpack.c.l.b16 %v218
    %v1009 = vunpack.c.l.b16 %v219
    %v1010 = vunpack.c.l.b16 %v220
    %v1011 = vunpack.c.l.b16 %v221
    %v1012 = vunpack.c.l.b16 %v222
    %v1013 = vunpack.c.l.b16 %v223
    %v1014 = vunpack.c.l.b16 %v224
    %v1015 = vunpack.c.l.b16 %v225
    %v1016 = vunpack.c.l.b16 %v226
    %v1017 = vunpack.c.l.b16 %v227
    %v1018 = vunpack.c.l.b16 %v228
    %v1019 = vunpack.c.l.b16 %v229
    %v1020 = vunpack.c.l.b16 %v230
    %v1021 = vunpack.c.l.b16 %v231
    %v1022 = vunpack.c.l.b16 %v232
    %v1023 = vunpack.c.l.b16 %v233
    %v1024 = vunpack.c.l.b16 %v234
    %v1025 = vunpack.c.l.b16 %v235
    %v1026 = vunpack.c.l.b16 %v236
    %v1027 = vunpack.c.l.b16 %v237
    %v1028 = vunpack.c.l.b16 %v238
    %v1029 = vunpack.c.l.b16 %v239
    %v1030 = vunpack.c.l.b16 %v240
    %v1031 = vunpack.c.l.b16 %v241
    %v1032 = vunpack.c.l.b16 %v242
    %v1033 = vunpack.c.l.b16 %v243
    %v1034 = vunpack.c.l.b16 %v244
    %v1035 = vunpack.c.l.b16 %v245
    %v1036 = vunpack.c.l.b16 %v246
    %v1037 = vunpack.c.l.b16 %v247
    %v1038 = vunpack.c.l.b16 %v248
    %v1039 = vunpack.c.l.b16 %v249
    %v1040 = vunpack.c.l.b16 %v250
    %v1041 = vunpack.c.l.b16 %v251
    %v1042 = vunpack.c.l.b16 %v252
    %v1043 = vunpack.c.l.b16 %v253
    %v1044 = vunpack.c.l.b16 %v254
    %v1045 = vunpack.c.l.b16 %v255
    %v1046 = vunpack.c.l.b16 %v256
    %v1047 = vunpack.c.l.b16 %v257
    %v1048 = vunpack.c.l.b16 %v258
    %v1049 = vunpack.c.l.b16 %v259
    %v1050 = vunpack.c.l.b16 %v260
    %v1051 = vunpack.c.l.b16 %v261
    %v1052 = vunpack.c.l.b16 %v262
    %v1053 = vunpack.c.l.b16 %v263
    %v1054 = vunpack.c.l.b16 %v264
    %v1055 = vunpack.c.l.b16 %v265
    %v1056 = vunpack.c.l.b16 %v266
    %v1057 = vunpack.c.l.b16 %v267
    %v1058 = vunpack.c.l.b16 %v268
    %v1059 = vunpack.c.l.b16 %v269
    %v1060 = vunpack.c.l.b16 %v270
    %v1061 = vunpack.c.l.b16 %v271
    %v1062 = vunpack.c.l.b16 %v272
    %v1063 = vunpack.c.l.b16 %v273
    %v1064 = vunpack.c.l.b16 %v274
    %v1065 = vunpack.c.l.b16 %v275
    %v1066 = vunpack.c.l.b16 %v276
    %v1067 = vunpack.c.l.b16 %v277
    %v1068 = vunpack.c.l.b16 %v278
    %v1069 = vunpack.c.l.b16 %v279
    %v1070 = vunpack.c.l.b16 %v280
    %v1071 = vunpack.c.l.b16 %v281
    %v1072 = vunpack.c.l.b16 %v282
    %v1073 = vunpack.c.l.b16 %v283
    %v1074 = vunpack.c.l.b16 %v284
    %v1075 = vunpack.c.l.b16 %v285
    %v1076 = vunpack.c.l.b16 %v286
    %v1077 = vunpack.c.l.b16 %v287
    %v1078 = vunpack.c.l.b16 %v288
    %v1079 = vunpack.c.l.b16 %v289
    %v1080 = vunpack.c.l.b16 %v290
    %v1081 = vunpack.c.l.b16 %v291
    %v1082 = vunpack.c.l.b16 %v292
    %v1083 = vunpack.c.l.b16 %v293
    %v1084 = vunpack.c.l.b16 %v294
    %v1085 = vunpack.c.l.b16 %v295
    %v1086 = vunpack.c.l.b16 %v296
    %v1087 = vunpack.c.l.b16 %v297
    %v1088 = vunpack.c.l.b16 %v298
    %v1089 = vunpack.c.l.b16 %v299
    %v1090 = vunpack.c.l.b16 %v300
    %v1091 = vunpack.c.l.b16 %v301
    %v1092 = vunpack.c.l.b16 %v302
    %v1093 = vunpack.c.l.b16 %v303
    %v1094 = vunpack.c.l.b16 %v304
    %v1095 = vunpack.c.l.b16 %v305
    %v1096 = vunpack.c.l.b16 %v306
    %v1097 = vunpack.c.l.b16 %v307
    %v1098 = vunpack.c.l.b16 %v308
    %v1099 = vunpack.c.l.b16 %v309
    %v1100 = vunpack.c.l.b16 %v310
    %v1101 = vunpack.c.l.b16 %v311
    %v1102 = vunpack.c.l.b16 %v312
    %v1103 = vunpack.c.l.b16 %v313
    %v1104 = vunpack.c.l.b16 %v314
    %v1105 = vunpack.c.l.b16 %v315
    %v1106 = vunpack.c.l.b16 %v316
    %v1107 = vunpack.c.l.b16 %v317
    %v1108 = vunpack.c.l.b16 %v318
    %v1109 = vunpack.c.l.b16 %v319
    %v1110 = vunpack.c.l.b16 %v320
    %v1111 = vunpack.c.l.b16 %v321
    %v1112 = vunpack.c.l.b16 %v322
    %v1113 = vunpack.c.l.b16 %v323
    %v1114 = vunpack.c.l.b16 %v324
    %v1115 = vunpack.c.l.b16 %v325
    %v1116 = vunpack.c.l.b16 %v326
    %v1117 = vunpack.c.l.b16 %v327
    %v1118 = vunpack.c.l.b16 %v328
    %v1119 = vunpack.c.l.b16 %v329
    %v1120 = vunpack.c.l.b16 %v330
    %v1121 = vunpack.c.l.b16 %v331
    %v1122 = vunpack.c.l.b16 %v332
    %v1123 = vunpack.c.l.b16 %v333
    %v1124 = vunpack.c.l.b16 %v334
    %v1125 = vunpack.c.l.b16 %v335
    %v1126 = vunpack.c.l.b16 %v336
    %v1127 = vunpack.c.l.b16 %v337
    %v1128 = vunpack.c.l.b16 %v338
    %v1129 = vunpack.c.l.b16 %v339
    %v1130 = vunpack.c.l.b16 %v340
    %v1131 = vunpack.c.l.b16 %v341
    %v1132 = vunpack.c.l.b16 %v342
    %v1133 = vunpack.c.l.b16 %v343
    %v1134 = vunpack.c.l.b16 %v344
    %v1135 = vunpack.c.l.b16 %v345
    %v1136 = vunpack.c.l.b16 %v346
    %v1137 = vunpack.c.l.b16 %v347
    %v1138 = vunpack.c.l.b16 %v348
    %v1139 = vunpack.c.l.b16 %v349
    %v1140 = vunpack.c.l.b16 %v350
    %v1141 = vunpack.c.l.b16 %v351
    %v1142 = vunpack.c.l.b16 %v352
    %v1143 = vunpack.c.l.b16 %v353
    %v1144 = vunpack.c.l.b16 %v354
    %v1145 = vunpack.c.l.b16 %v355
    %v1146 = vunpack.c.l.b16 %v356
    %v1147 = vunpack.c.l.b16 %v357
    %v1148 = vunpack.c.l.b16 %v358
    %v1149 = vunpack.c.l.b16 %v359
    %v1150 = vunpack.c.l.b16 %v360
    %v1151 = vunpack.c.l.b16 %v361
    %v1152 = vunpack.c.l.b16 %v362
    %v1153 = vunpack.c.l.b16 %v363
    %v1154 = vunpack.c.l.b16 %v364
    %v1155 = vunpack.c.l.b16 %v365
    %v1156 = vunpack.c.l.b16 %v366
    %v1157 = vunpack.c.l.b16 %v367
    %v1158 = vunpack.c.l.b16 %v368
    %v1159 = vunpack.c.l.b16 %v369
    %v1160 = vunpack.c.l.b16 %v370
    %v1161 = vunpack.c.l.b16 %v371
    %v1162 = vunpack.c.l.b16 %v372
    %v1163 = vunpack.c.l.b16 %v373
    %v1164 = vunpack.c.l.b16 %v374
    %v1165 = vunpack.c.l.b16 %v375
    %v1166 = vunpack.c.l.b16 %v376
    %v1167 = vunpack.c.l.b16 %v377
    %v1168 = vunpack.c.l.b16 %v378
    %v1169 = vunpack.c.l.b16 %v379
    %v1170 = vunpack.c.l.b16 %v380
    %v1171 = vunpack.c.l.b16 %v381
    %v1172 = vunpack.c.l.b16 %v382
    %v1173 = vunpack.c.l.b16 %v383
    %v1174 = vunpack.c.l.b16 %v384
    %v1175 = vunpack.c.l.b16 %v385
    %v1176 = vunpack.c.l.b16 %v386
    %v1177 = vunpack.c.l.b16 %v387
    %v1178 = vunpack.c.l.b16 %v388
    %v1179 = vunpack.c.l.b16 %v389
    %v1180 = vunpack.c.l.b16 %v390
    %v1181 = vunpack.c.l.b16 %v391
    %v1182 = vunpack.c.l.b16 %v392
    %v1183 = vunpack.c.l.b16 %v393
    %v1184 = vunpack.c.l.b16 %v394
    %v1185 = vunpack.c.l.b16 %v395
    %v1186 = vunpack.c.l.b16 %v396
    %v1187 = vunpack.c.l.b16 %v397
    %v1188 = vunpack.c.l.b16 %v398
    %v1189 = vunpack.c.l.b16 %v399
    %v1190 = vunpack.c.l.b16 %v400
    %v1191 = vunpack.c.l.b16 %v401
    %v1192 = vunpack.c.l.b16 %v402
    %v1193 = vunpack.c.l.b16 %v403
    %v1194 = vunpack.c.l.b16 %v404
    %v1195 = vunpack.c.l.b16 %v405
    %v1196 = vunpack.c.l.b16 %v406
    %v1197 = vunpack.c.l.b16 %v407
    %v1198 = vunpack.c.l.b16 %v408
    %v1199 = vunpack.c.l.b16 %v409
    %v1200 = vunpack.c.l.b16 %v410
    %v1201 = vunpack.c.l.b16 %v411
    %v1202 = vunpack.c.l.b16 %v412
    %v1203 = vunpack.c.l.b16 %v413
    %v1204 = vunpack.c.l.b16 %v414
    %v1205 = vunpack.c.l.b16 %v415
    %v1206 = vunpack.c.l.b16 %v416
    %v1207 = vunpack.c.l.b16 %v417
    %v1208 = vunpack.c.l.b16 %v418
    %v1209 = vunpack.c.l.b16 %v419
    %v1210 = vunpack.c.l.b16 %v420
    %v1211 = vunpack.c.l.b16 %v421
    %v1212 = vunpack.c.l.b16 %v422
    %v1213 = vunpack.c.l.b16 %v423
    %v1214 = vunpack.c.l.b16 %v424
    %v1215 = vunpack.c.l.b16 %v425
    %v1216 = vunpack.c.l.b16 %v426
    %v1217 = vunpack.c.l.b16 %v427
    %v1218 = vunpack.c.l.b16 %v428
    %v1219 = vunpack.c.l.b16 %v429
    %v1220 = vunpack.c.l.b16 %v430
    %v1221 = vunpack.c.l.b16 %v431
    %v1222 = vunpack.c.l.b16 %v432
    %v1223 = vunpack.c.l.b16 %v433
    %v1224 = vunpack.c.l.b16 %v434
    %v1225 = vunpack.c.l.b16 %v435
    %v1226 = vunpack.c.l.b16 %v436
    %v1227 = vunpack.c.l.b16 %v437
    %v1228 = vunpack.c.l.b16 %v438
    %v1229 = vunpack.c.l.b16 %v439
    %v1230 = vunpack.c.l.b16 %v440
    %v1231 = vunpack.c.l.b16 %v441
    %v1232 = vunpack.c.l.b16 %v442
    %v1233 = vunpack.c.l.b16 %v443
    %v1234 = vunpack.c.l.b16 %v444
    %v1235 = vunpack.c.l.b16 %v445
    %v1236 = vunpack.c.l.b16 %v446
    %v1237 = vunpack.c.l.b16 %v447
    %v1238 = vpack.c.b16 %v871, %v870
    %v1239 = vpack.c.b16 %v873, %v872
    %v1240 = vpack.c.b16 %v875, %v874
    %v1241 = vpack.c.b16 %v877, %v876
    %v1242 = vpack.c.b16 %v879, %v878
    %v1243 = vpack.c.b16 %v881, %v880
    %v1244 = vpack.c.b16 %v883, %v882
    %v1245 = vpack.c.b16 %v885, %v884
    %v1246 = vpack.c.b16 %v887, %v886
    %v1247 = vpack.c.b16 %v889, %v888
    %v1248 = vpack.c.b16 %v891, %v890
    %v1249 = vpack.c.b16 %v893, %v892
    %v1250 = vpack.c.b16 %v895, %v894
    %v1251 = vpack.c.b16 %v897, %v896
    %v1252 = vpack.c.b16 %v899, %v898
    %v1253 = vpack.c.b16 %v901, %v900
    %v1254 = vpack.c.b16 %v903, %v902
    %v1255 = vpack.c.b16 %v905, %v904
    %v1256 = vpack.c.b16 %v907, %v906
    %v1257 = vpack.c.b16 %v909, %v908
    %v1258 = vpack.c.b16 %v911, %v910
    %v1259 = vpack.c.b16 %v913, %v912
    %v1260 = vpack.c.b16 %v915, %v914
    %v1261 = vpack.c.b16 %v917, %v916
    %v1262 = vpack.c.b16 %v919, %v918
    %v1263 = vpack.c.b16 %v921, %v920
    %v1264 = vpack.c.b16 %v923, %v922
    %v1265 = vpack.c.b16 %v925, %v924
    %v1266 = vpack.c.b16 %v927, %v926
    %v1267 = vpack.c.b16 %v929, %v928
    %v1268 = vpack.c.b16 %v931, %v930
    %v1269 = vpack.c.b16 %v933, %v932
    %v1270 = vpack.c.b16 %v935, %v934
    %v1271 = vpack.c.b16 %v937, %v936
    %v1272 = vpack.c.b16 %v939, %v938
    %v1273 = vpack.c.b16 %v941, %v940
    %v1274 = vpack.c.b16 %v943, %v942
    %v1275 = vpack.c.b16 %v945, %v944
    %v1276 = vpack.c.b16 %v947, %v946
    %v1277 = vpack.c.b16 %v949, %v948
    %v1278 = vpack.c.b16 %v951, %v950
    %v1279 = vpack.c.b16 %v953, %v952
    %v1280 = vpack.c.b16 %v955, %v954
    %v1281 = vpack.c.b16 %v957, %v956
    %v1282 = vpack.c.b16 %v959, %v958
    %v1283 = vpack.c.b16 %v961, %v960
    %v1284 = vpack.c.b16 %v963, %v962
    %v1285 = vpack.c.b16 %v965, %v964
    %v1286 = vpack.c.b16 %v967, %v966
    %v1287 = vpack.c.b16 %v969, %v968
    %v1288 = vpack.c.b16 %v971, %v970
    %v1289 = vpack.c.b16 %v973, %v972
    %v1290 = vpack.c.b16 %v975, %v974
    %v1291 = vpack.c.b16 %v977, %v976
    %v1292 = vpack.c.b16 %v979, %v978
    %v1293 = vpack.c.b16 %v981, %v980
    %v1294 = vpack.c.b16 %v983, %v982
    %v1295 = vpack.c.b16 %v985, %v984
    %v1296 = vpack.c.b16 %v987, %v986
    %v1297 = vpack.c.b16 %v989, %v988
    %v1298 = vpack.c.b16 %v991, %v990
    %v1299 = vpack.c.b16 %v993, %v992
    %v1300 = vpack.c.b16 %v995, %v994
    %v1301 = vpack.c.b16 %v997, %v996
    %v1302 = vpack.c.b16 %v999, %v998
    %v1303 = vpack.c.b16 %v1001, %v1000
    %v1304 = vpack.c.b16 %v1003, %v1002
    %v1305 = vpack.c.b16 %v1005, %v1004
    %v1306 = vpack.c.b16 %v1007, %v1006
    %v1307 = vpack.c.b16 %v1009, %v1008
    %v1308 = vpack.c.b16 %v1011, %v1010
    %v1309 = vpack.c.b16 %v1013, %v1012
    %v1310 = vpack.c.b16 %v1015, %v1014
    %v1311 = vpack.c.b16 %v1017, %v1016
    %v1312 = vpack.c.b16 %v1019, %v1018
    %v1313 = vpack.c.b16 %v1021, %v1020
    %v1314 = vpack.c.b16 %v1023, %v1022
    %v1315 = vpack.c.b16 %v1025, %v1024
    %v1316 = vpack.c.b16 %v1027, %v1026
    %v1317 = vpack.c.b16 %v1029, %v1028
    %v1318 = vpack.c.b16 %v1031, %v1030
    %v1319 = vpack.c.b16 %v1033, %v1032
    %v1320 = vpack.c.b16 %v1035, %v1034
    %v1321 = vpack.c.b16 %v1037, %v1036
    %v1322 = vpack.c.b16 %v1039, %v1038
    %v1323 = vpack.c.b16 %v1041, %v1040
    %v1324 = vpack.c.b16 %v1043, %v1042
    %v1325 = vpack.c.b16 %v1045, %v1044
    %v1326 = vpack.c.b16 %v1047, %v1046
    %v1327 = vpack.c.b16 %v1049, %v1048
    %v1328 = vpack.c.b16 %v1051, %v1050
    %v1329 = vpack.c.b16 %v1053, %v1052
    %v1330 = vpack.c.b16 %v1055, %v1054
    %v1331 = vpack.c.b16 %v1057, %v1056
    %v1332 = vpack.c.b16 %v1059, %v1058
    %v1333 = vpack.c.b16 %v1061, %v1060
    %v1334 = vpack.c.b16 %v1063, %v1062
    %v1335 = vpack.c.b16 %v1065, %v1064
    %v1336 = vpack.c.b16 %v1067, %v1066
    %v1337 = vpack.c.b16 %v1069, %v1068
    %v1338 = vpack.c.b16 %v1071, %v1070
    %v1339 = vpack.c.b16 %v1073, %v1072
    %v1340 = vpack.c.b16 %v1075, %v1074
    %v1341 = vpack.c.b16 %v1077, %v1076
    %v1342 = vpack.c.b16 %v1079, %v1078
    %v1343 = vpack.c.b16 %v1081, %v1080
    %v1344 = vpack.c.b16 %v1083, %v1082
    %v1345 = vpack.c.b16 %v1085, %v1084
    %v1346 = vpack.c.b16 %v1087, %v1086
    %v1347 = vpack.c.b16 %v1089, %v1088
    %v1348 = vpack.c.b16 %v1091, %v1090
    %v1349 = vpack.c.b16 %v1093, %v1092
    %v1350 = vpack.c.b16 %v1095, %v1094
    %v1351 = vpack.c.b16 %v1097, %v1096
    %v1352 = vpack.c.b16 %v1099, %v1098
    %v1353 = vpack.c.b16 %v1101, %v1100
    %v1354 = vpack.c.b16 %v1103, %v1102
    %v1355 = vpack.c.b16 %v1105, %v1104
    %v1356 = vpack.c.b16 %v1107, %v1106
    %v1357 = vpack.c.b16 %v1109, %v1108
    %v1358 = vpack.c.b16 %v1111, %v1110
    %v1359 = vpack.c.b16 %v1113, %v1112
    %v1360 = vpack.c.b16 %v1115, %v1114
    %v1361 = vpack.c.b16 %v1117, %v1116
    %v1362 = vpack.c.b16 %v1119, %v1118
    %v1363 = vpack.c.b16 %v1121, %v1120
    %v1364 = vpack.c.b16 %v1123, %v1122
    %v1365 = vpack.c.b16 %v1125, %v1124
    %v1366 = vpack.c.b16 %v1127, %v1126
    %v1367 = vpack.c.b16 %v1129, %v1128
    %v1368 = vpack.c.b16 %v1131, %v1130
    %v1369 = vpack.c.b16 %v1133, %v1132
    %v1370 = vpack.c.b16 %v1135, %v1134
    %v1371 = vpack.c.b16 %v1137, %v1136
    %v1372 = vpack.c.b16 %v1139, %v1138
    %v1373 = vpack.c.b16 %v1141, %v1140
    %v1374 = vpack.c.b16 %v1143, %v1142
    %v1375 = vpack.c.b16 %v1145, %v1144
    %v1376 = vpack.c.b16 %v1147, %v1146
    %v1377 = vpack.c.b16 %v1149, %v1148
    %v1378 = vpack.c.b16 %v1151, %v1150
    %v1379 = vpack.c.b16 %v1153, %v1152
    %v1380 = vpack.c.b16 %v1155, %v1154
    %v1381 = vpack.c.b16 %v1157, %v1156
    %v1382 = vpack.c.b16 %v1159, %v1158
    %v1383 = vpack.c.b16 %v1161, %v1160
    %v1384 = vpack.c.b16 %v1163, %v1162
    %v1385 = vpack.c.b16 %v1165, %v1164
    %v1386 = vpack.c.b16 %v1167, %v1166
    %v1387 = vpack.c.b16 %v1169, %v1168
    %v1388 = vpack.c.b16 %v1171, %v1170
    %v1389 = vpack.c.b16 %v1173, %v1172
    %v1390 = vpack.c.b16 %v1175, %v1174
    %v1391 = vpack.c.b16 %v1177, %v1176
    %v1392 = vpack.c.b16 %v1179, %v1178
    %v1393 = vpack.c.b16 %v1181, %v1180
    %v1394 = vpack.c.b16 %v1183, %v1182
    %v1395 = vpack.c.b16 %v1185, %v1184
    %v1396 = vpack.c.b16 %v1187, %v1186
    %v1397 = vpack.c.b16 %v1189, %v1188
    %v1398 = vpack.c.b16 %v1191, %v1190
    %v1399 = vpack.c.b16 %v1193, %v1192
    %v1400 = vpack.c.b16 %v1195, %v1194
    %v1401 = vpack.c.b16 %v1197, %v1196
    %v1402 = vpack.c.b16 %v1199, %v1198
    %v1403 = vpack.c.b16 %v1201, %v1200
    %v1404 = vpack.c.b16 %v1203, %v1202
    %v1405 = vpack.c.b16 %v1205, %v1204
    %v1406 = vpack.c.b16 %v1207, %v1206
    %v1407 = vpack.c.b16 %v1209, %v1208
    %v1408 = vpack.c.b16 %v1211, %v1210
    %v1409 = vpack.c.b16 %v1213, %v1212
    %v1410 = vpack.c.b16 %v1215, %v1214
    %v1411 = vpack.c.b16 %v1217, %v1216
    %v1412 = vpack.c.b16 %v1219, %v1218
    %v1413 = vpack.c.b16 %v1221, %v1220
    %v1414 = vpack.c.b16 %v1223, %v1222
    %v1415 = vpack.c.b16 %v1225, %v1224
    %v1416 = vpack.c.b16 %v1227, %v1226
    %v1417 = vpack.c.b16 %v1229, %v1228
    %v1418 = vpack.c.b16 %v1231, %v1230
    %v1419 = vpack.c.b16 %v1233, %v1232
    %v1420 = vpack.c.b16 %v1235, %v1234
    %v1421 = vpack.c.b16 %v1237, %v1236
    %1606 = vmatpush.bf16.msra.mxu0 %v1245
    %1607 = vmatpush.bf16.msra.mxu0 %v1244
    %1608 = vmatpush.bf16.msra.mxu0 %v1243
    %1609 = vmatpush.bf16.msra.mxu0 %v1242
    %1610 = vmatpush.bf16.msra.mxu0 %v1241
    %1611 = vmatpush.bf16.msra.mxu0 %v1240
    %1612 = vmatpush.bf16.msra.mxu0 %v1239
    %1613 = vmatpush.bf16.msra.mxu0 %v1238
    %1614 = vmatmul.bf16.gmra.mxu0 %v452
    %v1615 = vpop.f32.mrf.mxu0
    %v1616 = vadd.f32 %v449, %v1615
    %v1617 = vpop.f32.mrf.mxu0
    %1618 = vdwg.mxu0
    %1619 = vmatpush.bf16.msra.mxu0 %v1253
    %1620 = vmatpush.bf16.msra.mxu0 %v1252
    %1621 = vmatpush.bf16.msra.mxu0 %v1251
    %1622 = vmatpush.bf16.msra.mxu0 %v1250
    %1623 = vmatpush.bf16.msra.mxu0 %v1249
    %1624 = vmatpush.bf16.msra.mxu0 %v1248
    %1625 = vmatpush.bf16.msra.mxu0 %v1247
    %1626 = vmatpush.bf16.msra.mxu0 %v1246
    %1627 = vmatmul.bf16.gmra.mxu0 %v453
    %v1628 = vpop.f32.mrf.mxu0
    %v1629 = vadd.f32 %v1616, %v1628
    %v1630 = vpop.f32.mrf.mxu0
    %1631 = vdwg.mxu0
    %1632 = vmatpush.bf16.msra.mxu0 %v1261
    %1633 = vmatpush.bf16.msra.mxu0 %v1260
    %1634 = vmatpush.bf16.msra.mxu0 %v1259
    %1635 = vmatpush.bf16.msra.mxu0 %v1258
    %1636 = vmatpush.bf16.msra.mxu0 %v1257
    %1637 = vmatpush.bf16.msra.mxu0 %v1256
    %1638 = vmatpush.bf16.msra.mxu0 %v1255
    %1639 = vmatpush.bf16.msra.mxu0 %v1254
    %1640 = vmatmul.bf16.gmra.mxu0 %v454
    %v1641 = vpop.f32.mrf.mxu0
    %v1642 = vadd.f32 %v1629, %v1641
    %v1643 = vpop.f32.mrf.mxu0
    %1644 = vdwg.mxu0
    %1645 = vmatpush.bf16.msra.mxu0 %v1269
    %1646 = vmatpush.bf16.msra.mxu0 %v1268
    %1647 = vmatpush.bf16.msra.mxu0 %v1267
    %1648 = vmatpush.bf16.msra.mxu0 %v1266
    %1649 = vmatpush.bf16.msra.mxu0 %v1265
    %1650 = vmatpush.bf16.msra.mxu0 %v1264
    %1651 = vmatpush.bf16.msra.mxu0 %v1263
    %1652 = vmatpush.bf16.msra.mxu0 %v1262
    %1653 = vmatmul.bf16.gmra.mxu0 %v455
    %v1654 = vpop.f32.mrf.mxu0
    %v1655 = vadd.f32 %v1642, %v1654
    %v1656 = vpop.f32.mrf.mxu0
    %1657 = vdwg.mxu0
    %1658 = vmatpush.bf16.msra.mxu0 %v1277
    %1659 = vmatpush.bf16.msra.mxu0 %v1276
    %1660 = vmatpush.bf16.msra.mxu0 %v1275
    %1661 = vmatpush.bf16.msra.mxu0 %v1274
    %1662 = vmatpush.bf16.msra.mxu0 %v1273
    %1663 = vmatpush.bf16.msra.mxu0 %v1272
    %1664 = vmatpush.bf16.msra.mxu0 %v1271
    %1665 = vmatpush.bf16.msra.mxu0 %v1270
    %1666 = vmatmul.bf16.gmra.mxu0 %v456
    %v1667 = vpop.f32.mrf.mxu0
    %v1668 = vadd.f32 %v1655, %v1667
    %v1669 = vpop.f32.mrf.mxu0
    %1670 = vdwg.mxu0
    %1671 = vmatpush.bf16.msra.mxu0 %v1285
    %1672 = vmatpush.bf16.msra.mxu0 %v1284
    %1673 = vmatpush.bf16.msra.mxu0 %v1283
    %1674 = vmatpush.bf16.msra.mxu0 %v1282
    %1675 = vmatpush.bf16.msra.mxu0 %v1281
    %1676 = vmatpush.bf16.msra.mxu0 %v1280
    %1677 = vmatpush.bf16.msra.mxu0 %v1279
    %1678 = vmatpush.bf16.msra.mxu0 %v1278
    %1679 = vmatmul.bf16.gmra.mxu0 %v457
    %v1680 = vpop.f32.mrf.mxu0
    %v1681 = vadd.f32 %v1668, %v1680
    %v1682 = vpop.f32.mrf.mxu0
    %1683 = vdwg.mxu0
    %1684 = vmatpush.bf16.msra.mxu0 %v1293
    %1685 = vmatpush.bf16.msra.mxu0 %v1292
    %1686 = vmatpush.bf16.msra.mxu0 %v1291
    %1687 = vmatpush.bf16.msra.mxu0 %v1290
    %1688 = vmatpush.bf16.msra.mxu0 %v1289
    %1689 = vmatpush.bf16.msra.mxu0 %v1288
    %1690 = vmatpush.bf16.msra.mxu0 %v1287
    %1691 = vmatpush.bf16.msra.mxu0 %v1286
    %1692 = vmatmul.bf16.gmra.mxu0 %v458
    %v1693 = vpop.f32.mrf.mxu0
    %v1694 = vadd.f32 %v1681, %v1693
    %v1695 = vpop.f32.mrf.mxu0
    %1696 = vdwg.mxu0
    %1697 = vmatpush.bf16.msra.mxu0 %v1301
    %1698 = vmatpush.bf16.msra.mxu0 %v1300
    %1699 = vmatpush.bf16.msra.mxu0 %v1299
    %1700 = vmatpush.bf16.msra.mxu0 %v1298
    %1701 = vmatpush.bf16.msra.mxu0 %v1297
    %1702 = vmatpush.bf16.msra.mxu0 %v1296
    %1703 = vmatpush.bf16.msra.mxu0 %v1295
    %1704 = vmatpush.bf16.msra.mxu0 %v1294
    %1705 = vmatmul.bf16.gmra.mxu0 %v459
    %v1706 = vpop.f32.mrf.mxu0
    %v1707 = vadd.f32 %v1694, %v1706
    %v1708 = vpop.f32.mrf.mxu0
    %1709 = vdwg.mxu0
    %1710 = vmatpush.bf16.msra.mxu0 %v1309
    %1711 = vmatpush.bf16.msra.mxu0 %v1308
    %1712 = vmatpush.bf16.msra.mxu0 %v1307
    %1713 = vmatpush.bf16.msra.mxu0 %v1306
    %1714 = vmatpush.bf16.msra.mxu0 %v1305
    %1715 = vmatpush.bf16.msra.mxu0 %v1304
    %1716 = vmatpush.bf16.msra.mxu0 %v1303
    %1717 = vmatpush.bf16.msra.mxu0 %v1302
    %1718 = vmatmul.bf16.gmra.mxu0 %v462
    %v1719 = vpop.f32.mrf.mxu0
    %v1720 = vadd.f32 %v1707, %v1719
    %v1721 = vpop.f32.mrf.mxu0
    %1722 = vdwg.mxu0
    %1723 = vmatpush.bf16.msra.mxu0 %v1317
    %1724 = vmatpush.bf16.msra.mxu0 %v1316
    %1725 = vmatpush.bf16.msra.mxu0 %v1315
    %1726 = vmatpush.bf16.msra.mxu0 %v1314
    %1727 = vmatpush.bf16.msra.mxu0 %v1313
    %1728 = vmatpush.bf16.msra.mxu0 %v1312
    %1729 = vmatpush.bf16.msra.mxu0 %v1311
    %1730 = vmatpush.bf16.msra.mxu0 %v1310
    %1731 = vmatmul.bf16.gmra.mxu0 %v463
    %v1732 = vpop.f32.mrf.mxu0
    %v1733 = vadd.f32 %v1720, %v1732
    %v1734 = vpop.f32.mrf.mxu0
    %1735 = vdwg.mxu0
    %1736 = vmatpush.bf16.msra.mxu0 %v1325
    %1737 = vmatpush.bf16.msra.mxu0 %v1324
    %1738 = vmatpush.bf16.msra.mxu0 %v1323
    %1739 = vmatpush.bf16.msra.mxu0 %v1322
    %1740 = vmatpush.bf16.msra.mxu0 %v1321
    %1741 = vmatpush.bf16.msra.mxu0 %v1320
    %1742 = vmatpush.bf16.msra.mxu0 %v1319
    %1743 = vmatpush.bf16.msra.mxu0 %v1318
    %1744 = vmatmul.bf16.gmra.mxu0 %v464
    %v1745 = vpop.f32.mrf.mxu0
    %v1746 = vadd.f32 %v1733, %v1745
    %v1747 = vpop.f32.mrf.mxu0
    %1748 = vdwg.mxu0
    %1749 = vmatpush.bf16.msra.mxu0 %v1333
    %1750 = vmatpush.bf16.msra.mxu0 %v1332
    %1751 = vmatpush.bf16.msra.mxu0 %v1331
    %1752 = vmatpush.bf16.msra.mxu0 %v1330
    %1753 = vmatpush.bf16.msra.mxu0 %v1329
    %1754 = vmatpush.bf16.msra.mxu0 %v1328
    %1755 = vmatpush.bf16.msra.mxu0 %v1327
    %1756 = vmatpush.bf16.msra.mxu0 %v1326
    %1757 = vmatmul.bf16.gmra.mxu0 %v465
    %v1758 = vpop.f32.mrf.mxu0
    %v1759 = vadd.f32 %v1746, %v1758
    %v1760 = vpop.f32.mrf.mxu0
    %1761 = vdwg.mxu0
    %1762 = vmatpush.bf16.msra.mxu0 %v1341
    %1763 = vmatpush.bf16.msra.mxu0 %v1340
    %1764 = vmatpush.bf16.msra.mxu0 %v1339
    %1765 = vmatpush.bf16.msra.mxu0 %v1338
    %1766 = vmatpush.bf16.msra.mxu0 %v1337
    %1767 = vmatpush.bf16.msra.mxu0 %v1336
    %1768 = vmatpush.bf16.msra.mxu0 %v1335
    %1769 = vmatpush.bf16.msra.mxu0 %v1334
    %1770 = vmatmul.bf16.gmra.mxu0 %v466
    %v1771 = vpop.f32.mrf.mxu0
    %v1772 = vadd.f32 %v1759, %v1771
    %v1773 = vpop.f32.mrf.mxu0
    %1774 = vdwg.mxu0
    %1775 = vmatpush.bf16.msra.mxu0 %v1349
    %1776 = vmatpush.bf16.msra.mxu0 %v1348
    %1777 = vmatpush.bf16.msra.mxu0 %v1347
    %1778 = vmatpush.bf16.msra.mxu0 %v1346
    %1779 = vmatpush.bf16.msra.mxu0 %v1345
    %1780 = vmatpush.bf16.msra.mxu0 %v1344
    %1781 = vmatpush.bf16.msra.mxu0 %v1343
    %1782 = vmatpush.bf16.msra.mxu0 %v1342
    %1783 = vmatmul.bf16.gmra.mxu0 %v467
    %v1784 = vpop.f32.mrf.mxu0
    %v1785 = vadd.f32 %v1772, %v1784
    %v1786 = vpop.f32.mrf.mxu0
    %1787 = vdwg.mxu0
    %1788 = vmatpush.bf16.msra.mxu0 %v1357
    %1789 = vmatpush.bf16.msra.mxu0 %v1356
    %1790 = vmatpush.bf16.msra.mxu0 %v1355
    %1791 = vmatpush.bf16.msra.mxu0 %v1354
    %1792 = vmatpush.bf16.msra.mxu0 %v1353
    %1793 = vmatpush.bf16.msra.mxu0 %v1352
    %1794 = vmatpush.bf16.msra.mxu0 %v1351
    %1795 = vmatpush.bf16.msra.mxu0 %v1350
    %1796 = vmatmul.bf16.gmra.mxu0 %v468
    %v1797 = vpop.f32.mrf.mxu0
    %v1798 = vadd.f32 %v1785, %v1797
    %v1799 = vpop.f32.mrf.mxu0
    %1800 = vdwg.mxu0
    %1801 = vmatpush.bf16.msra.mxu0 %v1365
    %1802 = vmatpush.bf16.msra.mxu0 %v1364
    %1803 = vmatpush.bf16.msra.mxu0 %v1363
    %1804 = vmatpush.bf16.msra.mxu0 %v1362
    %1805 = vmatpush.bf16.msra.mxu0 %v1361
    %1806 = vmatpush.bf16.msra.mxu0 %v1360
    %1807 = vmatpush.bf16.msra.mxu0 %v1359
    %1808 = vmatpush.bf16.msra.mxu0 %v1358
    %1809 = vmatmul.bf16.gmra.mxu0 %v469
    %v1810 = vpop.f32.mrf.mxu0
    %v1811 = vadd.f32 %v1798, %v1810
    %v1812 = vpop.f32.mrf.mxu0
    %1813 = vdwg.mxu0
    %1814 = vmatpush.bf16.msra.mxu0 %v1373
    %1815 = vmatpush.bf16.msra.mxu0 %v1372
    %1816 = vmatpush.bf16.msra.mxu0 %v1371
    %1817 = vmatpush.bf16.msra.mxu0 %v1370
    %1818 = vmatpush.bf16.msra.mxu0 %v1369
    %1819 = vmatpush.bf16.msra.mxu0 %v1368
    %1820 = vmatpush.bf16.msra.mxu0 %v1367
    %1821 = vmatpush.bf16.msra.mxu0 %v1366
    %1822 = vmatmul.bf16.gmra.mxu0 %v472
    %v1823 = vpop.f32.mrf.mxu0
    %v1824 = vadd.f32 %v1811, %v1823
    %v1825 = vpop.f32.mrf.mxu0
    %1826 = vdwg.mxu0
    %1827 = vmatpush.bf16.msra.mxu0 %v1381
    %1828 = vmatpush.bf16.msra.mxu0 %v1380
    %1829 = vmatpush.bf16.msra.mxu0 %v1379
    %1830 = vmatpush.bf16.msra.mxu0 %v1378
    %1831 = vmatpush.bf16.msra.mxu0 %v1377
    %1832 = vmatpush.bf16.msra.mxu0 %v1376
    %1833 = vmatpush.bf16.msra.mxu0 %v1375
    %1834 = vmatpush.bf16.msra.mxu0 %v1374
    %1835 = vmatmul.bf16.gmra.mxu0 %v473
    %v1836 = vpop.f32.mrf.mxu0
    %v1837 = vadd.f32 %v1824, %v1836
    %v1838 = vpop.f32.mrf.mxu0
    %1839 = vdwg.mxu0
    %1840 = vmatpush.bf16.msra.mxu0 %v1389
    %1841 = vmatpush.bf16.msra.mxu0 %v1388
    %1842 = vmatpush.bf16.msra.mxu0 %v1387
    %1843 = vmatpush.bf16.msra.mxu0 %v1386
    %1844 = vmatpush.bf16.msra.mxu0 %v1385
    %1845 = vmatpush.bf16.msra.mxu0 %v1384
    %1846 = vmatpush.bf16.msra.mxu0 %v1383
    %1847 = vmatpush.bf16.msra.mxu0 %v1382
    %1848 = vmatmul.bf16.gmra.mxu0 %v474
    %v1849 = vpop.f32.mrf.mxu0
    %v1850 = vadd.f32 %v1837, %v1849
    %v1851 = vpop.f32.mrf.mxu0
    %1852 = vdwg.mxu0
    %1853 = vmatpush.bf16.msra.mxu0 %v1397
    %1854 = vmatpush.bf16.msra.mxu0 %v1396
    %1855 = vmatpush.bf16.msra.mxu0 %v1395
    %1856 = vmatpush.bf16.msra.mxu0 %v1394
    %1857 = vmatpush.bf16.msra.mxu0 %v1393
    %1858 = vmatpush.bf16.msra.mxu0 %v1392
    %1859 = vmatpush.bf16.msra.mxu0 %v1391
    %1860 = vmatpush.bf16.msra.mxu0 %v1390
    %1861 = vmatmul.bf16.gmra.mxu0 %v475
    %v1862 = vpop.f32.mrf.mxu0
    %v1863 = vadd.f32 %v1850, %v1862
    %v1864 = vpop.f32.mrf.mxu0
    %1865 = vdwg.mxu0
    %1866 = vmatpush.bf16.msra.mxu0 %v1405
    %1867 = vmatpush.bf16.msra.mxu0 %v1404
    %1868 = vmatpush.bf16.msra.mxu0 %v1403
    %1869 = vmatpush.bf16.msra.mxu0 %v1402
    %1870 = vmatpush.bf16.msra.mxu0 %v1401
    %1871 = vmatpush.bf16.msra.mxu0 %v1400
    %1872 = vmatpush.bf16.msra.mxu0 %v1399
    %1873 = vmatpush.bf16.msra.mxu0 %v1398
    %1874 = vmatmul.bf16.gmra.mxu0 %v476
    %v1875 = vpop.f32.mrf.mxu0
    %v1876 = vadd.f32 %v1863, %v1875
    %v1877 = vpop.f32.mrf.mxu0
    %1878 = vdwg.mxu0
    %1879 = vmatpush.bf16.msra.mxu0 %v1413
    %1880 = vmatpush.bf16.msra.mxu0 %v1412
    %1881 = vmatpush.bf16.msra.mxu0 %v1411
    %1882 = vmatpush.bf16.msra.mxu0 %v1410
    %1883 = vmatpush.bf16.msra.mxu0 %v1409
    %1884 = vmatpush.bf16.msra.mxu0 %v1408
    %1885 = vmatpush.bf16.msra.mxu0 %v1407
    %1886 = vmatpush.bf16.msra.mxu0 %v1406
    %1887 = vmatmul.bf16.gmra.mxu0 %v477
    %v1888 = vpop.f32.mrf.mxu0
    %v1889 = vadd.f32 %v1876, %v1888
    %v1890 = vpop.f32.mrf.mxu0
    %1891 = vdwg.mxu0
    %1892 = vmatpush.bf16.msra.mxu0 %v1421
    %1893 = vmatpush.bf16.msra.mxu0 %v1420
    %1894 = vmatpush.bf16.msra.mxu0 %v1419
    %1895 = vmatpush.bf16.msra.mxu0 %v1418
    %1896 = vmatpush.bf16.msra.mxu0 %v1417
    %1897 = vmatpush.bf16.msra.mxu0 %v1416
    %1898 = vmatpush.bf16.msra.mxu0 %v1415
    %1899 = vmatpush.bf16.msra.mxu0 %v1414
    %1900 = vmatmul.bf16.gmra.mxu0 %v478
    %v1901 = vpop.f32.mrf.mxu0
    %v1902 = vadd.f32 %v1889, %v1901
    %v1903 = vpop.f32.mrf.mxu0
    %1904 = vdwg.mxu0
    %v1905 = vmax.f32 %v1902, 0.0
    %v1906 = vpack.c.bf16 %v1905, %v1905
    %v1907 = vld [vmem:[#allocation7] sm:$0xf]
    %v1908 = vld [vmem:[#allocation7 + $0x4] sm:$0xf]
    %v1909 = vld [vmem:[#allocation7 + $0x8] sm:$0xf]
    %v1910 = vld [vmem:[#allocation7 + $0xc] sm:$0xf]
    %v1911 = vld [vmem:[#allocation7 + $0x10] sm:$0xf]
    %v1912 = vld [vmem:[#allocation7 + $0x14] sm:$0xf]
    %v1913 = vld [vmem:[#allocation7 + $0x18] sm:$0xf]
    %v1914 = vld [vmem:[#allocation7 + $0x1c] sm:$0xf]
    %v1915 = vld [vmem:[#allocation7 + $0x20] sm:$0xf]
    %v1916 = vld [vmem:[#allocation7 + $0x24] sm:$0xf]
    %v1917 = vld [vmem:[#allocation7 + $0x28] sm:$0xf]
    %v1918 = vld [vmem:[#allocation7 + $0x2c] sm:$0xf]
    %v1919 = vld [vmem:[#allocation7 + $0x30] sm:$0xf]
    %v1920 = vld [vmem:[#allocation7 + $0x34] sm:$0xf]
    %v1921 = vld [vmem:[#allocation7 + $0x38] sm:$0xf]
    %v1922 = vld [vmem:[#allocation7 + $0x3c] sm:$0xf]
    %v1923 = vld [vmem:[#allocation8 + $0x1] sm:$0x1]
    %v1924 = vperm.slane %v1923, 0
    %v1941 = vunpack.c.l.b16 %v1907
    %v1942 = vunpack.c.l.b16 %v1908
    %v1943 = vunpack.c.l.b16 %v1909
    %v1944 = vunpack.c.l.b16 %v1910
    %v1945 = vunpack.c.l.b16 %v1911
    %v1946 = vunpack.c.l.b16 %v1912
    %v1947 = vunpack.c.l.b16 %v1913
    %v1948 = vunpack.c.l.b16 %v1914
    %v1949 = vunpack.c.l.b16 %v1915
    %v1950 = vunpack.c.l.b16 %v1916
    %v1951 = vunpack.c.l.b16 %v1917
    %v1952 = vunpack.c.l.b16 %v1918
    %v1953 = vunpack.c.l.b16 %v1919
    %v1954 = vunpack.c.l.b16 %v1920
    %v1955 = vunpack.c.l.b16 %v1921
    %v1956 = vunpack.c.l.b16 %v1922
    %v1957 = vpack.c.b16 %v1942, %v1941
    %v1958 = vpack.c.b16 %v1944, %v1943
    %v1959 = vpack.c.b16 %v1946, %v1945
    %v1960 = vpack.c.b16 %v1948, %v1947
    %v1961 = vpack.c.b16 %v1950, %v1949
    %v1962 = vpack.c.b16 %v1952, %v1951
    %v1963 = vpack.c.b16 %v1954, %v1953
    %v1964 = vpack.c.b16 %v1956, %v1955
    %1973 = vmatpush.bf16.msra.mxu0 %v1964
    %1974 = vmatpush.bf16.msra.mxu0 %v1963
    %1975 = vmatpush.bf16.msra.mxu0 %v1962
    %1976 = vmatpush.bf16.msra.mxu0 %v1961
    %1977 = vmatpush.bf16.msra.mxu0 %v1960
    %1978 = vmatpush.bf16.msra.mxu0 %v1959
    %1979 = vmatpush.bf16.msra.mxu0 %v1958
    %1980 = vmatpush.bf16.msra.mxu0 %v1957
    %1981 = vmatmul.bf16.gmra.mxu0 %v1906
    %v1982 = vpop.f32.mrf.mxu0
    %v1983 = vadd.f32 %v1924, %v1982
    %v1984 = vpop.f32.mrf.mxu0
    %1985 = vdwg.mxu0
    %v1986 = vmax.f32 %v1983, 0.0
    %v1987 = vpack.c.bf16 %v1986, %v1986
    %v1988 = vld [vmem:[#allocation7 + $0x40] sm:$0xf]
    %v1989 = vld [vmem:[#allocation7 + $0x44] sm:$0xf]
    %v1990 = vld [vmem:[#allocation7 + $0x48] sm:$0xf]
    %v1991 = vld [vmem:[#allocation7 + $0x4c] sm:$0xf]
    %v1992 = vld [vmem:[#allocation7 + $0x50] sm:$0xf]
    %v1993 = vld [vmem:[#allocation7 + $0x54] sm:$0xf]
    %v1994 = vld [vmem:[#allocation7 + $0x58] sm:$0xf]
    %v1995 = vld [vmem:[#allocation7 + $0x5c] sm:$0xf]
    %v1996 = vld [vmem:[#allocation7 + $0x60] sm:$0xf]
    %v1997 = vld [vmem:[#allocation7 + $0x64] sm:$0xf]
    %v1998 = vld [vmem:[#allocation7 + $0x68] sm:$0xf]
    %v1999 = vld [vmem:[#allocation7 + $0x6c] sm:$0xf]
    %v2000 = vld [vmem:[#allocation7 + $0x70] sm:$0xf]
    %v2001 = vld [vmem:[#allocation7 + $0x74] sm:$0xf]
    %v2002 = vld [vmem:[#allocation7 + $0x78] sm:$0xf]
    %v2003 = vld [vmem:[#allocation7 + $0x7c] sm:$0xf]
    %v2004 = vld [vmem:[#allocation8 + $0x2] sm:$0x1]
    %v2005 = vperm.slane %v2004, 0
    %v2022 = vunpack.c.l.b16 %v1988
    %v2023 = vunpack.c.l.b16 %v1989
    %v2024 = vunpack.c.l.b16 %v1990
    %v2025 = vunpack.c.l.b16 %v1991
    %v2026 = vunpack.c.l.b16 %v1992
    %v2027 = vunpack.c.l.b16 %v1993
    %v2028 = vunpack.c.l.b16 %v1994
    %v2029 = vunpack.c.l.b16 %v1995
    %v2030 = vunpack.c.l.b16 %v1996
    %v2031 = vunpack.c.l.b16 %v1997
    %v2032 = vunpack.c.l.b16 %v1998
    %v2033 = vunpack.c.l.b16 %v1999
    %v2034 = vunpack.c.l.b16 %v2000
    %v2035 = vunpack.c.l.b16 %v2001
    %v2036 = vunpack.c.l.b16 %v2002
    %v2037 = vunpack.c.l.b16 %v2003
    %v2038 = vpack.c.b16 %v2023, %v2022
    %v2039 = vpack.c.b16 %v2025, %v2024
    %v2040 = vpack.c.b16 %v2027, %v2026
    %v2041 = vpack.c.b16 %v2029, %v2028
    %v2042 = vpack.c.b16 %v2031, %v2030
    %v2043 = vpack.c.b16 %v2033, %v2032
    %v2044 = vpack.c.b16 %v2035, %v2034
    %v2045 = vpack.c.b16 %v2037, %v2036
    %2054 = vmatpush.bf16.msra.mxu0 %v2045
    %2055 = vmatpush.bf16.msra.mxu0 %v2044
    %2056 = vmatpush.bf16.msra.mxu0 %v2043
    %2057 = vmatpush.bf16.msra.mxu0 %v2042
    %2058 = vmatpush.bf16.msra.mxu0 %v2041
    %2059 = vmatpush.bf16.msra.mxu0 %v2040
    %2060 = vmatpush.bf16.msra.mxu0 %v2039
    %2061 = vmatpush.bf16.msra.mxu0 %v2038
    %2062 = vmatmul.bf16.gmra.mxu0 %v1987
    %v2063 = vpop.f32.mrf.mxu0
    %v2064 = vadd.f32 %v2005, %v2063
    %v2065 = vpop.f32.mrf.mxu0
    %2066 = vdwg.mxu0
    %v2067 = vmax.f32 %v2064, 0.0
    %v2068 = vpack.c.bf16 %v2067, %v2067
    %v2069 = vld [vmem:[#allocation7 + $0x80] sm:$0xf]
    %v2070 = vld [vmem:[#allocation7 + $0x84] sm:$0xf]
    %v2071 = vld [vmem:[#allocation7 + $0x88] sm:$0xf]
    %v2072 = vld [vmem:[#allocation7 + $0x8c] sm:$0xf]
    %v2073 = vld [vmem:[#allocation7 + $0x90] sm:$0xf]
    %v2074 = vld [vmem:[#allocation7 + $0x94] sm:$0xf]
    %v2075 = vld [vmem:[#allocation7 + $0x98] sm:$0xf]
    %v2076 = vld [vmem:[#allocation7 + $0x9c] sm:$0xf]
    %v2077 = vld [vmem:[#allocation7 + $0xa0] sm:$0xf]
    %v2078 = vld [vmem:[#allocation7 + $0xa4] sm:$0xf]
    %v2079 = vld [vmem:[#allocation7 + $0xa8] sm:$0xf]
    %v2080 = vld [vmem:[#allocation7 + $0xac] sm:$0xf]
    %v2081 = vld [vmem:[#allocation7 + $0xb0] sm:$0xf]
    %v2082 = vld [vmem:[#allocation7 + $0xb4] sm:$0xf]
    %v2083 = vld [vmem:[#allocation7 + $0xb8] sm:$0xf]
    %v2084 = vld [vmem:[#allocation7 + $0xbc] sm:$0xf]
    %v2085 = vld [vmem:[#allocation8 + $0x3] sm:$0x1]
    %v2086 = vperm.slane %v2085, 0
    %v2103 = vunpack.c.l.b16 %v2069
    %v2104 = vunpack.c.l.b16 %v2070
    %v2105 = vunpack.c.l.b16 %v2071
    %v2106 = vunpack.c.l.b16 %v2072
    %v2107 = vunpack.c.l.b16 %v2073
    %v2108 = vunpack.c.l.b16 %v2074
    %v2109 = vunpack.c.l.b16 %v2075
    %v2110 = vunpack.c.l.b16 %v2076
    %v2111 = vunpack.c.l.b16 %v2077
    %v2112 = vunpack.c.l.b16 %v2078
    %v2113 = vunpack.c.l.b16 %v2079
    %v2114 = vunpack.c.l.b16 %v2080
    %v2115 = vunpack.c.l.b16 %v2081
    %v2116 = vunpack.c.l.b16 %v2082
    %v2117 = vunpack.c.l.b16 %v2083
    %v2118 = vunpack.c.l.b16 %v2084
    %v2119 = vpack.c.b16 %v2104, %v2103
    %v2120 = vpack.c.b16 %v2106, %v2105
    %v2121 = vpack.c.b16 %v2108, %v2107
    %v2122 = vpack.c.b16 %v2110, %v2109
    %v2123 = vpack.c.b16 %v2112, %v2111
    %v2124 = vpack.c.b16 %v2114, %v2113
    %v2125 = vpack.c.b16 %v2116, %v2115
    %v2126 = vpack.c.b16 %v2118, %v2117
    %2135 = vmatpush.bf16.msra.mxu0 %v2126
    %2136 = vmatpush.bf16.msra.mxu0 %v2125
    %2137 = vmatpush.bf16.msra.mxu0 %v2124
    %2138 = vmatpush.bf16.msra.mxu0 %v2123
    %2139 = vmatpush.bf16.msra.mxu0 %v2122
    %2140 = vmatpush.bf16.msra.mxu0 %v2121
    %2141 = vmatpush.bf16.msra.mxu0 %v2120
    %2142 = vmatpush.bf16.msra.mxu0 %v2119
    %2143 = vmatmul.bf16.gmra.mxu0 %v2068
    %v2144 = vpop.f32.mrf.mxu0
    %v2145 = vadd.f32 %v2086, %v2144
    %v2146 = vpop.f32.mrf.mxu0
    %2147 = vdwg.mxu0
    %v2148 = vxor.u32 %v2145, 2147483648
    %v2149 = vmul.f32 %v2148, 1.442695
    %v2150 = vpow.pop %v2149
    %v2151 = vadd.f32 %v2150, 1.0
    %v2152 = vrcp.pop %v2151
    %v2153 = vmul.f32 %v2151, %v2152
    %v2154 = vsub.f32 1.0, %v2153
    %v2155 = vmul.f32 %v2152, %v2154
    %v2156 = vadd.f32 %v2152, %v2155
    %vm2157 = vweird.f32 %v2151
    %vm2158 = vweird.f32 %v2152
    %vm2159 = vmor %vm2157, %vm2158
    %v2160 = vsel %vm2159, %v2152, %v2156
    %v2161 = vand.u32 2147483647, %v2151
    %vm2162 = vcmp.eq.f32.partialorder %v2161, 8.507059e+37
    %v2163 = vand.u32 %v2151, 2147483648
    %v2164 = vor.u32 1.1754944e-38, %v2163
    %v2165 = vsel %vm2162, %v2164, %v2160
    %v2166 = vmul.f32 1.0, %v2165
    %vm2167 = vcmask 33792
    %2168 = vst.msk [vmem:[#allocation10] sm:$0x3] %vm2167, %v2166
    // Predicated region
    $region34: #{tpu_custom_call.1} parent=1 // pred_check
      _
    $region35: #{tpu_custom_call.1} parent=1 // pred_check_branch
      %2170 = sbr.rel (0) target = $region37
    $region36: #{tpu_custom_call.1} parent=1 // pred_region
      %2172 = vsyncadd [#allocation4], 0
      %s2174 = sshll.u32 [#allocation10], 4
      %s2175 = int_to_ptr.vmem [resolvable:$true] %s2174
      %s2176 = sshll.u32 %s4, 4
      %s2177 = int_to_ptr.hbm [resolvable:$true] %s2176
      %2179 = dma.vmem_to_hbm [thread:$0]  %s2175, 32, %s2177, [#allocation4]
    $region37: #{tpu_custom_call.1} parent=1 // pred_fallthru
      _
    // Predicated region
    $region38: #{tpu_custom_call.1} parent=1 // pred_check
      _
    $region39: #{tpu_custom_call.1} parent=1 // pred_check_branch
      %2181 = sbr.rel (0) target = $region41
    $region40: #{tpu_custom_call.1} parent=1 // pred_region
      %2183 = dma.done [#allocation4], 32
    $region41: #{tpu_custom_call.1} parent=1 // pred_fallthru
      _
    %2184 = vsyncpa [#allocation3], 1
    %2185 = vsyncpa [#allocation6], 1
    %2186 = vsyncpa [#allocation9], 1
    %2187 = vsyncpa [#allocation4], 1

</llo_original>
